<compile_context>
chip_gen: v6e
topology: v6e:2x2x1
jax: 0.10.0
libtpu: 0.0.40
codegen_flags: <defaults>
</compile_context>

<pallas_src>
import functools

import jax
import jax.numpy as jnp
from jax import lax
from jax.experimental import pallas as pl
from jax.experimental.pallas import tpu as pltpu


def _attn_kernel(x_ref, q_ref, k_ref, v_ref, gamma_ref, o_ref,
                 acc_scr, m_scr, l_scr):
    """One (batch, query-tile, key-tile) step of online-softmax attention.

    x_ref : (1, C,  TQ)  residual input tile (resident across key steps)
    q_ref : (1, TQ, C8P) query tile (resident across key steps)
    k_ref : (1, C8P, TK) key tile (streams along the key axis)
    v_ref : (1, TK, C)   value tile (streams along the key axis)
    o_ref : (1, C,  TQ)  output tile (written in finalize)
    """
    ki = pl.program_id(2)
    nk = pl.num_programs(2)

    # ---- per (batch, query-tile) init ----------------------------------------
    @pl.when(ki == 0)
    def _init():
        acc_scr[...] = jnp.zeros_like(acc_scr)
        m_scr[...] = jnp.full_like(m_scr, -jnp.inf)
        l_scr[...] = jnp.zeros_like(l_scr)

    # ---- one key/value tile: online-softmax update ----------------------------
    q = q_ref[0].astype(jnp.float32)                                   # (TQ, C8P)
    k = k_ref[0].astype(jnp.float32)                                   # (C8P, TK)
    v = v_ref[0].astype(jnp.float32)                                   # (TK, C)

    # energy tile: standard (TQ, C8P) @ (C8P, TK) -> (TQ, TK), f32 on the MXU.
    s = lax.dot_general(q, k, (((1,), (0,)), ((), ())),
                        preferred_element_type=jnp.float32)

    m_prev = m_scr[...]                                                # (TQ, 1)
    m_new = jnp.maximum(m_prev, jnp.max(s, axis=-1, keepdims=True))
    alpha = jnp.exp(m_prev - m_new)                                    # (TQ, 1)
    p = jnp.exp(s - m_new)                                             # (TQ, TK)
    l_scr[...] = alpha * l_scr[...] + jnp.sum(p, axis=-1, keepdims=True)
    # standard (TQ, TK) @ (TK, C) -> (TQ, C); no trans_b relayout of v.
    acc_scr[...] = alpha * acc_scr[...] + lax.dot_general(
        p, v, (((1,), (0,)), ((), ())), preferred_element_type=jnp.float32)
    m_scr[...] = m_new

    # ---- finalize: normalize, residual add (f32), lane-dense (C, TQ) store ----
    @pl.when(ki == nk - 1)
    def _finalize():
        inv_l = 1.0 / l_scr[...]                                       # (TQ, 1)
        attn_out = jnp.transpose(acc_scr[...] * inv_l)                 # (C, TQ)
        out = x_ref[0].astype(jnp.float32) + gamma_ref[0] * attn_out
        o_ref[0] = out.astype(o_ref.dtype)


def _pick_tile(n, target):
    """Largest multiple of 128 that divides n and is <= target; else full extent."""
    if n < 128 or n % 128 != 0:
        return n
    t = min(max(target, 128), n)
    t = (t // 128) * 128
    while n % t != 0:
        t -= 128
    return t


def conv_self_attn(x_nchw, wq, wk, wv, gamma, *, precise=False,
                   tq_target=512, tk_target=512):
    """SAGAN self-attention.  x: (B,C,H,W); wq/wk: (C//8,C); wv: (C,C); gamma: (1,)."""
    B, C, H, W = x_nchw.shape
    c8 = wq.shape[0]
    N = H * W

    # bf16 HBM streams for Q/K/V on the fast path (halves DMA traffic); the
    # in-kernel math is always f32 (softmax, accumulation, residual).
    stream_dtype = jnp.float32 if precise else jnp.bfloat16

    # Pad the tiny C//8 projection rows up to a sublane multiple; the zero rows
    # contribute exactly 0 to the energy contraction.
    c8p = max(8, -(-c8 // 8) * 8)
    pad = ((0, c8p - c8), (0, 0))
    wq_p = jnp.pad(wq.astype(jnp.float32), pad)
    wk_p = jnp.pad(wk.astype(jnp.float32), pad)
    wv_f = wv.astype(jnp.float32)

    # NCHW -> (B, C, N): pure reshape, no HBM transpose.
    x_bcn = x_nchw.reshape(B, C, N)
    xf = x_bcn.astype(jnp.float32)

    # ---- projections hoisted out of the kernel (done once, by XLA) -------------
    q_bnc = jnp.einsum("oc,bcn->bno", wq_p, xf).astype(stream_dtype)   # (B, N, c8p)
    k_bcn = jnp.einsum("oc,bcn->bon", wk_p, xf).astype(stream_dtype)   # (B, c8p, N)
    v_bnc = jnp.einsum("oc,bcn->bno", wv_f, xf).astype(stream_dtype)   # (B, N, C)

    tq = _pick_tile(N, tq_target)
    tk = _pick_tile(N, tk_target)
    grid = (B, N // tq, N // tk)

    # Advisory cost so XLA overlaps the projection matmuls with the custom call.
    stream_bytes = jnp.dtype(stream_dtype).itemsize
    x_bytes = jnp.dtype(x_bcn.dtype).itemsize
    flops = 2 * B * N * N * (c8p + C)
    bytes_accessed = int(
        2 * B * C * N * x_bytes                       # residual x in + out
        + B * N * c8p * stream_bytes                  # Q
        + (N // tq) * B * N * (c8p + C) * stream_bytes  # K/V re-streamed per q tile
    )
    cost = pl.CostEstimate(flops=int(flops),
                           transcendentals=int(B * N * N),
                           bytes_accessed=bytes_accessed)

    out_bcn = pl.pallas_call(
        _attn_kernel,
        out_shape=jax.ShapeDtypeStruct((B, C, N), x_nchw.dtype),
        grid_spec=pltpu.PrefetchScalarGridSpec(
            num_scalar_prefetch=0,
            grid=grid,
            in_specs=[
                # residual x tile: ignores ki -> resident across key steps
                pl.BlockSpec((1, C, tq), lambda b, qi, ki: (b, 0, qi)),
                # Q tile: ignores ki -> resident across key steps
                pl.BlockSpec((1, tq, c8p), lambda b, qi, ki: (b, qi, 0)),
                # K tile: streams along ki
                pl.BlockSpec((1, c8p, tk), lambda b, qi, ki: (b, 0, ki)),
                # V tile: streams along ki, already (tk, C) so PV is a standard matmul
                pl.BlockSpec((1, tk, C), lambda b, qi, ki: (b, ki, 0)),
                # gamma scalar
                pl.BlockSpec(memory_space=pltpu.MemorySpace.SMEM),
            ],
            out_specs=pl.BlockSpec((1, C, tq), lambda b, qi, ki: (b, 0, qi)),
            scratch_shapes=[
                pltpu.VMEM((tq, C), jnp.float32),    # output accumulator
                pltpu.VMEM((tq, 1), jnp.float32),    # running max
                pltpu.VMEM((tq, 1), jnp.float32),    # running sum
            ],
        ),
        compiler_params=pltpu.CompilerParams(
            dimension_semantics=("parallel", "parallel", "arbitrary")),
        cost_estimate=cost,
    )(x_bcn, q_bnc, k_bcn, v_bnc, gamma.astype(jnp.float32))

    return out_bcn.reshape(B, C, H, W)


def reference(x_nchw, wq, wk, wv, gamma):
    B, C, H, W = x_nchw.shape
    N = H * W
    x = jnp.transpose(x_nchw.reshape(B, C, N), (0, 2, 1))              # (B, N, C)
    q = jnp.einsum("bnc,oc->bno", x, wq)
    k = jnp.einsum("bnc,oc->bno", x, wk)
    v = jnp.einsum("bnc,oc->bno", x, wv)
    energy = jnp.einsum("bno,bmo->bnm", q, k)
    attn = jax.nn.softmax(energy, axis=-1)
    out = jnp.einsum("bnm,bmc->bnc", attn, v)
    res = x + gamma[0] * out
    return jnp.transpose(res, (0, 2, 1)).reshape(B, C, H, W)


if __name__ == "__main__":
    keys = jax.random.split(jax.random.PRNGKey(0), 9)

    # Main config: N = 256 -> 2x2 (query, key) tiles at tile=128, so the online
    # softmax accumulation across key tiles is actually exercised.
    B, C, H, W = 2, 32, 16, 16
    C8 = C // 8
    x = jax.random.normal(keys[0], (B, C, H, W), dtype=jnp.float32)
    wq = jax.random.normal(keys[1], (C8, C), dtype=jnp.float32) * 0.1
    wk = jax.random.normal(keys[2], (C8, C), dtype=jnp.float32) * 0.1
    wv = jax.random.normal(keys[3], (C, C), dtype=jnp.float32) * 0.1

    for gamma_val in (0.0, 0.5):   # gamma is initialized to 0 in the PyTorch module
        gamma = jnp.full((1,), gamma_val, dtype=jnp.float32)
        ref = reference(x, wq, wk, wv, gamma)

        # f32 verification path (f32 Q/K/V streams).
        out_f32 = conv_self_attn(x, wq, wk, wv, gamma, precise=True,
                                 tq_target=128, tk_target=128)
        jax.block_until_ready(out_f32)
        assert out_f32.shape == (B, C, H, W)
        assert jnp.allclose(out_f32, ref, atol=1e-3, rtol=1e-3), (
            f"precise path mismatch (gamma={gamma_val})")

        # Default fast path: bf16 Q/K/V streams, f32 in-kernel math.
        out_fast = conv_self_attn(x, wq, wk, wv, gamma,
                                  tq_target=128, tk_target=128)
        jax.block_until_ready(out_fast)
        assert jnp.allclose(out_fast, ref, atol=3e-2, rtol=3e-2), (
            f"bf16-stream path mismatch (gamma={gamma_val})")

    # Small / unaligned config: N = 36 (< 128) exercises the full-extent tile
    # fallback and the C//8 -> sublane padding path.
    B2, C2, H2, W2 = 1, 16, 6, 6
    x2 = jax.random.normal(keys[4], (B2, C2, H2, W2), dtype=jnp.float32)
    wq2 = jax.random.normal(keys[5], (C2 // 8, C2), dtype=jnp.float32) * 0.1
    wk2 = jax.random.normal(keys[6], (C2 // 8, C2), dtype=jnp.float32) * 0.1
    wv2 = jax.random.normal(keys[7], (C2, C2), dtype=jnp.float32) * 0.1
    gamma2 = jnp.full((1,), 0.5, dtype=jnp.float32)
    out2 = conv_self_attn(x2, wq2, wk2, wv2, gamma2, precise=True)
    jax.block_until_ready(out2)
    ref2 = reference(x2, wq2, wk2, wv2, gamma2)
    assert jnp.allclose(out2, ref2, atol=1e-3, rtol=1e-3), "small-shape mismatch"

    print("KERNEL_OK")
</pallas_src>

<mosaic_0001>
module attributes {stable_mosaic.version = 11 : i64} {
  func.func @_attn_kernel(%arg0: i32, %arg1: i32, %arg2: i32, %arg3: memref<1x32x128xf32, #tpu.memory_space<vmem>>, %arg4: memref<1x128x8xf32, #tpu.memory_space<vmem>>, %arg5: memref<1x8x128xf32, #tpu.memory_space<vmem>>, %arg6: memref<1x128x32xf32, #tpu.memory_space<vmem>>, %arg7: memref<1xf32, #tpu.memory_space<smem>>, %arg8: memref<1x32x128xf32, #tpu.memory_space<vmem>>, %arg9: memref<128x32xf32, #tpu.memory_space<vmem>>, %arg10: memref<128x1xf32, #tpu.memory_space<vmem>>, %arg11: memref<128x1xf32, #tpu.memory_space<vmem>>) attributes {dimension_semantics = [#tpu.dimension_semantics<parallel>, #tpu.dimension_semantics<parallel>, #tpu.dimension_semantics<arbitrary>], iteration_bounds = array<i64: 2, 2, 2>, scalar_prefetch = 0 : i64, scratch_operands = 3 : i64, tpu.core_type = #tpu.core_type<tc>, window_params = [{transform_indices = @transform_0, window_bounds = array<i64: 1, 32, 128>}, {transform_indices = @transform_1, window_bounds = array<i64: 1, 128, 8>}, {transform_indices = @transform_2, window_bounds = array<i64: 1, 8, 128>}, {transform_indices = @transform_3, window_bounds = array<i64: 1, 128, 32>}, {transform_indices = @transform_4, window_bounds = array<i64: 1>}, {transform_indices = @transform_5, window_bounds = array<i64: 1, 32, 128>}]} {
    %c0_i32 = arith.constant 0 : i32
    %0 = arith.cmpi eq, %arg2, %c0_i32 : i32
    %1 = arith.extui %0 : i1 to i32
    %c0_i32_0 = arith.constant 0 : i32
    %2 = arith.cmpi ne, %1, %c0_i32_0 : i32
    scf.if %2 {
      %cst_25 = arith.constant 0.000000e+00 : f32
      %35 = vector.broadcast %cst_25 : f32 to vector<128x32xf32>
      %c0_26 = arith.constant 0 : index
      %c0_27 = arith.constant 0 : index
      %36 = vector.load %arg9[%c0_26, %c0_27] : memref<128x32xf32, #tpu.memory_space<vmem>>, vector<128x32xf32>
      tpu.vector_store %arg9[%c0_26, %c0_27], %35 {strides = array<i32>} : memref<128x32xf32, #tpu.memory_space<vmem>>, vector<128x32xf32>,
      %cst_28 = arith.constant 0xFF800000 : f32
      %37 = vector.broadcast %cst_28 : f32 to vector<128x1xf32>
      %c0_29 = arith.constant 0 : index
      %c0_30 = arith.constant 0 : index
      %38 = vector.load %arg10[%c0_29, %c0_30] : memref<128x1xf32, #tpu.memory_space<vmem>>, vector<128x1xf32>
      tpu.vector_store %arg10[%c0_29, %c0_30], %37 {strides = array<i32>} : memref<128x1xf32, #tpu.memory_space<vmem>>, vector<128x1xf32>,
      %cst_31 = arith.constant 0.000000e+00 : f32
      %39 = vector.broadcast %cst_31 : f32 to vector<128x1xf32>
      %c0_32 = arith.constant 0 : index
      %c0_33 = arith.constant 0 : index
      %40 = vector.load %arg11[%c0_32, %c0_33] : memref<128x1xf32, #tpu.memory_space<vmem>>, vector<128x1xf32>
      tpu.vector_store %arg11[%c0_32, %c0_33], %39 {strides = array<i32>} : memref<128x1xf32, #tpu.memory_space<vmem>>, vector<128x1xf32>,
    } else {
    }
    %c0 = arith.constant 0 : index
    %c0_1 = arith.constant 0 : index
    %c0_2 = arith.constant 0 : index
    %3 = vector.load %arg4[%c0, %c0_1, %c0_2] : memref<1x128x8xf32, #tpu.memory_space<vmem>>, vector<1x128x8xf32>
    %4 = vector.shape_cast %3 : vector<1x128x8xf32> to vector<128x8xf32>
    %c0_3 = arith.constant 0 : index
    %c0_4 = arith.constant 0 : index
    %c0_5 = arith.constant 0 : index
    %5 = vector.load %arg5[%c0_3, %c0_4, %c0_5] : memref<1x8x128xf32, #tpu.memory_space<vmem>>, vector<1x8x128xf32>
    %6 = vector.shape_cast %5 : vector<1x8x128xf32> to vector<8x128xf32>
    %c0_6 = arith.constant 0 : index
    %c0_7 = arith.constant 0 : index
    %c0_8 = arith.constant 0 : index
    %7 = vector.load %arg6[%c0_6, %c0_7, %c0_8] : memref<1x128x32xf32, #tpu.memory_space<vmem>>, vector<1x128x32xf32>
    %8 = vector.shape_cast %7 : vector<1x128x32xf32> to vector<128x32xf32>
    %cst = arith.constant dense<0.000000e+00> : vector<128x128xf32>
    %9 = tpu.matmul %4, %6, %cst {dimension_numbers = #tpu.dot_dimension_numbers<[1], [0], [0], [1], [0, 0, 1, 1], [], []>} : vector<128x8xf32>, vector<8x128xf32>, vector<128x128xf32> -> vector<128x128xf32>
    %c0_9 = arith.constant 0 : index
    %c0_10 = arith.constant 0 : index
    %10 = vector.load %arg10[%c0_9, %c0_10] : memref<128x1xf32, #tpu.memory_space<vmem>>, vector<128x1xf32>
    %cst_11 = arith.constant dense<0xFF800000> : vector<128xf32>
    %11 = vector.multi_reduction <maximumf>, %9, %cst_11 [1] : vector<128x128xf32> to vector<128xf32>
    %12 = vector.shape_cast %11 : vector<128xf32> to vector<128x1xf32>
    %13 = arith.maximumf %10, %12 : vector<128x1xf32>
    %14 = arith.subf %10, %13 : vector<128x1xf32>
    %15 = math.exp %14 : vector<128x1xf32>
    %16 = vector.broadcast %13 : vector<128x1xf32> to vector<128x128xf32>
    %17 = arith.subf %9, %16 : vector<128x128xf32>
    %18 = math.exp %17 : vector<128x128xf32>
    %c0_12 = arith.constant 0 : index
    %c0_13 = arith.constant 0 : index
    %19 = vector.load %arg11[%c0_12, %c0_13] : memref<128x1xf32, #tpu.memory_space<vmem>>, vector<128x1xf32>
    %20 = arith.mulf %15, %19 : vector<128x1xf32>
    %cst_14 = arith.constant dense<0.000000e+00> : vector<128xf32>
    %21 = vector.multi_reduction <add>, %18, %cst_14 [1] : vector<128x128xf32> to vector<128xf32>
    %22 = vector.shape_cast %21 : vector<128xf32> to vector<128x1xf32>
    %23 = arith.addf %20, %22 : vector<128x1xf32>
    %c0_15 = arith.constant 0 : index
    %c0_16 = arith.constant 0 : index
    %24 = vector.load %arg11[%c0_15, %c0_16] : memref<128x1xf32, #tpu.memory_space<vmem>>, vector<128x1xf32>
    tpu.vector_store %arg11[%c0_15, %c0_16], %23 {strides = array<i32>} : memref<128x1xf32, #tpu.memory_space<vmem>>, vector<128x1xf32>,
    %c0_17 = arith.constant 0 : index
    %c0_18 = arith.constant 0 : index
    %25 = vector.load %arg9[%c0_17, %c0_18] : memref<128x32xf32, #tpu.memory_space<vmem>>, vector<128x32xf32>
    %26 = vector.broadcast %15 : vector<128x1xf32> to vector<128x32xf32>
    %27 = arith.mulf %26, %25 : vector<128x32xf32>
    %cst_19 = arith.constant dense<0.000000e+00> : vector<128x32xf32>
    %28 = tpu.matmul %18, %8, %cst_19 {dimension_numbers = #tpu.dot_dimension_numbers<[1], [0], [0], [1], [0, 0, 1, 1], [], []>} : vector<128x128xf32>, vector<128x32xf32>, vector<128x32xf32> -> vector<128x32xf32>
    %29 = arith.addf %27, %28 : vector<128x32xf32>
    %c0_20 = arith.constant 0 : index
    %c0_21 = arith.constant 0 : index
    %30 = vector.load %arg9[%c0_20, %c0_21] : memref<128x32xf32, #tpu.memory_space<vmem>>, vector<128x32xf32>
    tpu.vector_store %arg9[%c0_20, %c0_21], %29 {strides = array<i32>} : memref<128x32xf32, #tpu.memory_space<vmem>>, vector<128x32xf32>,
    %c0_22 = arith.constant 0 : index
    %c0_23 = arith.constant 0 : index
    %31 = vector.load %arg10[%c0_22, %c0_23] : memref<128x1xf32, #tpu.memory_space<vmem>>, vector<128x1xf32>
    tpu.vector_store %arg10[%c0_22, %c0_23], %13 {strides = array<i32>} : memref<128x1xf32, #tpu.memory_space<vmem>>, vector<128x1xf32>,
    %c1_i32 = arith.constant 1 : i32
    %32 = arith.cmpi eq, %arg2, %c1_i32 : i32
    %33 = arith.extui %32 : i1 to i32
    %c0_i32_24 = arith.constant 0 : i32
    %34 = arith.cmpi ne, %33, %c0_i32_24 : i32
    scf.if %34 {
      %c0_25 = arith.constant 0 : index
      %c0_26 = arith.constant 0 : index
      %35 = vector.load %arg11[%c0_25, %c0_26] : memref<128x1xf32, #tpu.memory_space<vmem>>, vector<128x1xf32>
      %cst_27 = arith.constant 1.000000e+00 : f32
      %36 = vector.broadcast %cst_27 : f32 to vector<128x1xf32>
      %37 = arith.divf %36, %35 : vector<128x1xf32>
      %c0_28 = arith.constant 0 : index
      %c0_29 = arith.constant 0 : index
      %38 = vector.load %arg9[%c0_28, %c0_29] : memref<128x32xf32, #tpu.memory_space<vmem>>, vector<128x32xf32>
      %39 = vector.broadcast %37 : vector<128x1xf32> to vector<128x32xf32>
      %40 = arith.mulf %38, %39 : vector<128x32xf32>
      %41 = tpu.transpose %40, [1, 0] : vector<128x32xf32> -> vector<32x128xf32>
      %c0_30 = arith.constant 0 : index
      %c0_31 = arith.constant 0 : index
      %c0_32 = arith.constant 0 : index
      %42 = vector.load %arg3[%c0_30, %c0_31, %c0_32] : memref<1x32x128xf32, #tpu.memory_space<vmem>>, vector<1x32x128xf32>
      %43 = vector.shape_cast %42 : vector<1x32x128xf32> to vector<32x128xf32>
      %c0_33 = arith.constant 0 : index
      %44 = memref.load %arg7[%c0_33] : memref<1xf32, #tpu.memory_space<smem>>
      %45 = vector.broadcast %44 : f32 to vector<32x128xf32>
      %46 = arith.mulf %45, %41 : vector<32x128xf32>
      %47 = arith.addf %43, %46 : vector<32x128xf32>
      %c0_34 = arith.constant 0 : index
      %c0_35 = arith.constant 0 : index
      %c0_36 = arith.constant 0 : index
      %48 = vector.load %arg8[%c0_34, %c0_35, %c0_36] : memref<1x32x128xf32, #tpu.memory_space<vmem>>, vector<1x32x128xf32>
      %49 = vector.shape_cast %48 : vector<1x32x128xf32> to vector<32x128xf32>
      %50 = vector.shape_cast %47 : vector<32x128xf32> to vector<1x32x128xf32>
      tpu.vector_store %arg8[%c0_34, %c0_35, %c0_36], %50 {strides = array<i32>} : memref<1x32x128xf32, #tpu.memory_space<vmem>>, vector<1x32x128xf32>,
    } else {
    }
    return
  }
  func.func @transform_0(%arg0: i32, %arg1: i32, %arg2: i32) -> (i32, i32, i32) {
    %c0_i32 = arith.constant 0 : i32
    %c0_i32_0 = arith.constant 0 : i32
    return %arg0, %c0_i32, %arg1 : i32, i32, i32
  }
  func.func @transform_1(%arg0: i32, %arg1: i32, %arg2: i32) -> (i32, i32, i32) {
    %c0_i32 = arith.constant 0 : i32
    %c0_i32_0 = arith.constant 0 : i32
    return %arg0, %arg1, %c0_i32 : i32, i32, i32
  }
  func.func @transform_2(%arg0: i32, %arg1: i32, %arg2: i32) -> (i32, i32, i32) {
    %c0_i32 = arith.constant 0 : i32
    %c0_i32_0 = arith.constant 0 : i32
    return %arg0, %c0_i32, %arg2 : i32, i32, i32
  }
  func.func @transform_3(%arg0: i32, %arg1: i32, %arg2: i32) -> (i32, i32, i32) {
    %c0_i32 = arith.constant 0 : i32
    %c0_i32_0 = arith.constant 0 : i32
    return %arg0, %arg2, %c0_i32 : i32, i32, i32
  }
  func.func @transform_4(%arg0: i32, %arg1: i32, %arg2: i32) -> i32 {
    %c0_i32 = arith.constant 0 : i32
    %c0_i32_0 = arith.constant 0 : i32
    return %c0_i32 : i32
  }
  func.func @transform_5(%arg0: i32, %arg1: i32, %arg2: i32) -> (i32, i32, i32) {
    %c0_i32 = arith.constant 0 : i32
    %c0_i32_0 = arith.constant 0 : i32
    return %arg0, %c0_i32, %arg1 : i32, i32, i32
  }
}

</mosaic_0001>

<llo_original>
// kernel: tpu_custom_call.1
$region0: #{tpu_custom_call.1}
  #allocation0 [shape = 'u32[]', space=smem, size = 0x4, offset = 0x4, fixed_abs, tag = 'smem constant byte address 0x4 - core index']
  #allocation1 [shape = 'u32[144,128]{1,0:T(1,128)}', space=vmem, size = 0x12000, scoped, tag = 'internal scratch']
  #allocation2 [shape = 'f32[128,32]{1,0:T(8,128)}', space=vmem, size = 0x10000, scoped, tag = 'scratch operand']
  #allocation3 [shape = 'f32[128,1]{1,0:T(8,128)}', space=vmem, size = 0x10000, scoped, tag = 'scratch operand']
  #allocation4 [shape = 'f32[128,1]{1,0:T(8,128)}', space=vmem, size = 0x10000, scoped, tag = 'scratch operand']
  #allocation5 [shape = 'f32[1]{0:T(128)S(6)}', space=smem, size = 0x200, scoped, tag = 'scoped memory for tpu_custom_call.1']
  %s0 = inlined_call_operand.vmem [shape: f32[2,32,256], index: 0, kind: input, shape index: {}]
  %s1 = inlined_call_operand.vmem [shape: f32[2,256,8], index: 1, kind: input, shape index: {}]
  %s2 = inlined_call_operand.vmem [shape: f32[2,8,256], index: 2, kind: input, shape index: {}]
  %s3 = inlined_call_operand.vmem [shape: f32[2,256,32], index: 3, kind: input, shape index: {}]
  %s4 = inlined_call_operand.<no memory space> [shape: f32[1], index: 4, kind: input, shape index: {}]
  %s5 = inlined_call_operand.hbm [shape: f32[2,32,256], index: 5, kind: output, shape index: {}]
  %s6 = sld [smem:[#allocation0]]
  $region99: #{tpu_custom_call.1} parent=0
    _
  %s8 = ssub.s32 1, %s6
  %s9 = scalar_select 0, %s8, %s6
  %10 = sst [smem:[#allocation5]] %s4
  $region1: #{tpu_custom_call.1} parent=0
    #allocation6 [shape = 'u8[32768]{0}', space=vmem, size = 0x8000, scoped, tag = 'input window, operand 0']
    #allocation7 [shape = 'u8[32768]{0}', space=vmem, size = 0x8000, scoped, tag = 'output window, operand 0']
    #allocation8 [shape = 's32[2]{0}', space=sflag, size = 0x8, scoped, tag = 'scoped memory for tpu_custom_call.1']
    %11 = vsyncpa [#allocation8], 0
    %s12 = scalar_lea.sflag [#allocation8], 1
    %13 = vsyncpa %s12, 0
    loop: start=0, step=1, limit=10
    $region2: #{tpu_custom_call.1} parent=1 // loop_pre_header
      _
    $region3: #{tpu_custom_call.1} parent=1 // loop_header
      %s15 = sphi 0, %s19
      %p16 = scmp.ge.s32.totalorder %s15, 10
      %s22 = sphi 0, %s41
      %s23 = sphi 0, %s37
      %s24 = sphi 0, %s33
      %s25 = sphi 0, %s22
      %s26 = sphi 0, %s23
      %s27 = sphi 0, %s24
      %s28 = sphi 0, %s25
      %s29 = sphi 0, %s26
      %s30 = sphi 0, %s27
      %s46 = sphi 0, %s48
      %s49 = sphi 0, %s46
      %s50 = sphi 0, %s49
      %s66 = sphi 0, %s50
      %s74 = sphi 0, %s76
      %s77 = sphi 0, %s74
      %s78 = sphi 0, %s77
      %s94 = sphi 0, %s78
      %s102 = sphi 0, %s104
      %s105 = sphi 0, %s102
      %s106 = sphi 0, %s105
      %s122 = sphi 0, %s106
      %s130 = sphi 0, %s132
      %s133 = sphi 0, %s130
      %s134 = sphi 0, %s133
      %s150 = sphi 0, %s134
      %s154 = sphi 0, %s154
      %s156 = sphi 0, %s154
      %s157 = sphi 0, %s156
      %s171 = sphi 0, %s157
      %s179 = sphi 0, %s181
      %s182 = sphi 0, %s179
      %s183 = sphi 0, %s182
      %s199 = sphi 0, %s183
    $region4: #{tpu_custom_call.1} parent=1 // loop_header_branch
      %18 = sbr.rel (%p16) target = $region8
    $region5: #{tpu_custom_call.1} parent=1 // loop_body
      %s20 = ssub.s32 %s15, 1
      %s21 = ssub.s32 %s15, 2
      %s31 = sadd.s32 1, %s24
      %p32 = scmp.ge.s32.totalorder %s31, 2
      %s33 = scalar_select %p32, 0, %s31
      %s34 = sadd.s32 1, %s23
      %s35 = scalar_select %p32, %s34, %s23
      %p36 = scmp.ge.s32.totalorder %s35, 2
      %s37 = scalar_select %p36, 0, %s35
      %s38 = sadd.s32 1, %s22
      %s39 = scalar_select %p36, %s38, %s22
      %p40 = scmp.ge.s32.totalorder %s39, 2
      %s41 = scalar_select %p40, 0, %s39
      %s42 = ssub.s32 %s22, %s41
      %s43 = ssub.s32 %s23, %s37
      %s44 = sor.u32 %s42, %s43
      %p45 = scmp.eq.s32.totalorder %s44, 0
      %s47 = sadd.s32 %s46, 1
      %s48 = scalar_select %p45, %s46, %s47
      %p51 = pneg %p45
      %p52 = scmp.eq.s32.totalorder %s15, 7
      %p53 = por %p51, %p52
      %p54 = scmp.ne.s32.totalorder %s46, %s49
      %p55 = scmp.eq.s32.totalorder %s15, 0
      %p56 = por %p54, %p55
      %p57 = scmp.ne.s32.totalorder %s46, %s49
      %p58 = scmp.eq.s32.totalorder %s20, 7
      %p59 = por %p57, %p58
      %p60 = scmp.ne.s32.totalorder %s49, %s50
      %p61 = scmp.eq.s32.totalorder %s20, 0
      %p62 = por %p60, %p61
      %p63 = scmp.ne.s32.totalorder %s49, %s50
      %p64 = scmp.eq.s32.totalorder %s21, 7
      %p65 = por %p63, %p64
      %p67 = scmp.ne.s32.totalorder %s50, %s66
      %p68 = scmp.eq.s32.totalorder %s21, 0
      %p69 = por %p67, %p68
      %s70 = ssub.s32 %s22, %s41
      %s71 = ssub.s32 %s23, %s37
      %s72 = sor.u32 %s70, %s71
      %p73 = scmp.eq.s32.totalorder %s72, 0
      %s75 = sadd.s32 %s74, 1
      %s76 = scalar_select %p73, %s74, %s75
      %p79 = pneg %p73
      %p80 = scmp.eq.s32.totalorder %s15, 7
      %p81 = por %p79, %p80
      %p82 = scmp.ne.s32.totalorder %s74, %s77
      %p83 = scmp.eq.s32.totalorder %s15, 0
      %p84 = por %p82, %p83
      %p85 = scmp.ne.s32.totalorder %s74, %s77
      %p86 = scmp.eq.s32.totalorder %s20, 7
      %p87 = por %p85, %p86
      %p88 = scmp.ne.s32.totalorder %s77, %s78
      %p89 = scmp.eq.s32.totalorder %s20, 0
      %p90 = por %p88, %p89
      %p91 = scmp.ne.s32.totalorder %s77, %s78
      %p92 = scmp.eq.s32.totalorder %s21, 7
      %p93 = por %p91, %p92
      %p95 = scmp.ne.s32.totalorder %s78, %s94
      %p96 = scmp.eq.s32.totalorder %s21, 0
      %p97 = por %p95, %p96
      %s98 = ssub.s32 %s22, %s41
      %s99 = ssub.s32 %s24, %s33
      %s100 = sor.u32 %s98, %s99
      %p101 = scmp.eq.s32.totalorder %s100, 0
      %s103 = sadd.s32 %s102, 1
      %s104 = scalar_select %p101, %s102, %s103
      %p107 = pneg %p101
      %p108 = scmp.eq.s32.totalorder %s15, 7
      %p109 = por %p107, %p108
      %p110 = scmp.ne.s32.totalorder %s102, %s105
      %p111 = scmp.eq.s32.totalorder %s15, 0
      %p112 = por %p110, %p111
      %p113 = scmp.ne.s32.totalorder %s102, %s105
      %p114 = scmp.eq.s32.totalorder %s20, 7
      %p115 = por %p113, %p114
      %p116 = scmp.ne.s32.totalorder %s105, %s106
      %p117 = scmp.eq.s32.totalorder %s20, 0
      %p118 = por %p116, %p117
      %p119 = scmp.ne.s32.totalorder %s105, %s106
      %p120 = scmp.eq.s32.totalorder %s21, 7
      %p121 = por %p119, %p120
      %p123 = scmp.ne.s32.totalorder %s106, %s122
      %p124 = scmp.eq.s32.totalorder %s21, 0
      %p125 = por %p123, %p124
      %s126 = ssub.s32 %s22, %s41
      %s127 = ssub.s32 %s24, %s33
      %s128 = sor.u32 %s126, %s127
      %p129 = scmp.eq.s32.totalorder %s128, 0
      %s131 = sadd.s32 %s130, 1
      %s132 = scalar_select %p129, %s130, %s131
      %p135 = pneg %p129
      %p136 = scmp.eq.s32.totalorder %s15, 7
      %p137 = por %p135, %p136
      %p138 = scmp.ne.s32.totalorder %s130, %s133
      %p139 = scmp.eq.s32.totalorder %s15, 0
      %p140 = por %p138, %p139
      %p141 = scmp.ne.s32.totalorder %s130, %s133
      %p142 = scmp.eq.s32.totalorder %s20, 7
      %p143 = por %p141, %p142
      %p144 = scmp.ne.s32.totalorder %s133, %s134
      %p145 = scmp.eq.s32.totalorder %s20, 0
      %p146 = por %p144, %p145
      %p147 = scmp.ne.s32.totalorder %s133, %s134
      %p148 = scmp.eq.s32.totalorder %s21, 7
      %p149 = por %p147, %p148
      %p151 = scmp.ne.s32.totalorder %s134, %s150
      %p152 = scmp.eq.s32.totalorder %s21, 0
      %p153 = por %p151, %p152
      %s155 = sadd.s32 %s154, 1
      %p158 = scmp.eq.s32.totalorder %s15, 7
      %p159 = scmp.ne.s32.totalorder %s154, %s156
      %p160 = scmp.eq.s32.totalorder %s15, 0
      %p161 = por %p159, %p160
      %p162 = scmp.ne.s32.totalorder %s154, %s156
      %p163 = scmp.eq.s32.totalorder %s20, 7
      %p164 = por %p162, %p163
      %p165 = scmp.ne.s32.totalorder %s156, %s157
      %p166 = scmp.eq.s32.totalorder %s20, 0
      %p167 = por %p165, %p166
      %p168 = scmp.ne.s32.totalorder %s156, %s157
      %p169 = scmp.eq.s32.totalorder %s21, 7
      %p170 = por %p168, %p169
      %p172 = scmp.ne.s32.totalorder %s157, %s171
      %p173 = scmp.eq.s32.totalorder %s21, 0
      %p174 = por %p172, %p173
      %s175 = ssub.s32 %s22, %s41
      %s176 = ssub.s32 %s23, %s37
      %s177 = sor.u32 %s175, %s176
      %p178 = scmp.eq.s32.totalorder %s177, 0
      %s180 = sadd.s32 %s179, 1
      %s181 = scalar_select %p178, %s179, %s180
      %p184 = pneg %p178
      %p185 = scmp.eq.s32.totalorder %s15, 7
      %p186 = por %p184, %p185
      %p187 = scmp.ne.s32.totalorder %s179, %s182
      %p188 = scmp.eq.s32.totalorder %s15, 0
      %p189 = por %p187, %p188
      %p190 = scmp.ne.s32.totalorder %s179, %s182
      %p191 = scmp.eq.s32.totalorder %s20, 7
      %p192 = por %p190, %p191
      %p193 = scmp.ne.s32.totalorder %s182, %s183
      %p194 = scmp.eq.s32.totalorder %s20, 0
      %p195 = por %p193, %p194
      %p196 = scmp.ne.s32.totalorder %s182, %s183
      %p197 = scmp.eq.s32.totalorder %s21, 7
      %p198 = por %p196, %p197
      %p200 = scmp.ne.s32.totalorder %s183, %s199
      %p201 = scmp.eq.s32.totalorder %s21, 0
      %p202 = por %p200, %p201
      %p203 = scmp.le.s32.totalorder 1, %s15
      %p204 = scmp.lt.s32.totalorder %s15, 9
      %p205 = pnand %p203, %p204
      %p206 = pneg %p205
      // Predicated region
      $region9: #{tpu_custom_call.1} parent=5 // pred_check
        _
      $region10: #{tpu_custom_call.1} parent=5 // pred_check_branch
        %208 = sbr.rel (%p205) target = $region12
      $region11: #{tpu_custom_call.1} parent=5 // pred_region
        %s209 = ssub.s32 %s15, 1
        // Predicated region
        $region13: #{tpu_custom_call.1} parent=11 // pred_check
          %p210 = pneg %p167
        $region14: #{tpu_custom_call.1} parent=11 // pred_check_branch
          %212 = sbr.rel (%p210) target = $region16
        $region15: #{tpu_custom_call.1} parent=11 // pred_region
          _
        $region16: #{tpu_custom_call.1} parent=11 // pred_fallthru
          _
      $region12: #{tpu_custom_call.1} parent=5 // pred_fallthru
        _
      %p213 = scmp.lt.s32.totalorder %s15, 8
      // Predicated region
      $region17: #{tpu_custom_call.1} parent=5 // pred_check
        %p214 = pneg %p213
      $region18: #{tpu_custom_call.1} parent=5 // pred_check_branch
        %216 = sbr.rel (%p214) target = $region20
      $region19: #{tpu_custom_call.1} parent=5 // pred_region
        // Predicated region
        $region21: #{tpu_custom_call.1} parent=19 // pred_check
          %p217 = pneg %p56
        $region22: #{tpu_custom_call.1} parent=19 // pred_check_branch
          %219 = sbr.rel (%p217) target = $region24
        $region23: #{tpu_custom_call.1} parent=19 // pred_region
          %s220 = sand.u32 %s46, 1
          %s221 = sand.u32 %s46, 1
          %s222 = smul.addr %s221, 32
          %s223 = scalar_lea.vmem [#allocation6], %s222
          %s224 = smul.addr %s22, 8
          %s225 = sadd.s32 %s23, %s224
          %s226 = smul.addr %s225, 8
          %s227 = scalar_lea.vmem %s0, %s226
          // Predicated region
          $region25: #{tpu_custom_call.1} parent=23 // pred_check
            _
          $region26: #{tpu_custom_call.1} parent=23 // pred_check_branch
            %229 = sbr.rel (0) target = $region28
          $region27: #{tpu_custom_call.1} parent=23 // pred_region
            // Predicated region
            $region29: #{tpu_custom_call.1} parent=27 // pred_check
              _
            $region30: #{tpu_custom_call.1} parent=27 // pred_check_branch
              %231 = sbr.rel (0) target = $region32
            $region31: #{tpu_custom_call.1} parent=27 // pred_region
              // Predicated region
              $region44: #{tpu_custom_call.1} parent=31 // pred_check
                _
              $region45: #{tpu_custom_call.1} parent=31 // pred_check_branch
                %253 = sbr.rel (0) target = $region47
              $region46: #{tpu_custom_call.1} parent=31 // pred_region
                loop: start=0, step=1, limit=1
                $region48: #{tpu_custom_call.1} parent=46 // loop_pre_header
                  _
                $region49: #{tpu_custom_call.1} parent=46 // loop_header
                  %s255 = sphi 0, %s259
                  %p256 = scmp.ge.s32.totalorder %s255, 1
                  %s260 = sphi %s227, %s227
                  %s261 = sphi %s223, %s223
                $region50: #{tpu_custom_call.1} parent=46 // loop_header_branch
                  %258 = sbr.rel (%p256) target = $region54
                $region51: #{tpu_custom_call.1} parent=46 // loop_body
                  %v262 = vld [vmem:[%s260] sm:$0xff]
                  %263 = vst [vmem:[%s261] sm:$0xff] %v262
                  %v264 = vld [vmem:[%s260 + $0x10] sm:$0xff]
                  %265 = vst [vmem:[%s261 + $0x8] sm:$0xff] %v264
                  %v266 = vld [vmem:[%s260 + $0x20] sm:$0xff]
                  %267 = vst [vmem:[%s261 + $0x10] sm:$0xff] %v266
                  %v268 = vld [vmem:[%s260 + $0x30] sm:$0xff]
                  %269 = vst [vmem:[%s261 + $0x18] sm:$0xff] %v268
                $region52: #{tpu_custom_call.1} parent=46 // loop_footer
                  %s259 = sadd.s32 1, %s255
                $region53: #{tpu_custom_call.1} parent=46 // loop_footer_branch
                  %254 = sbr.rel target = $region49
                $region54: #{tpu_custom_call.1} parent=46 // loop_exit
                  _
              $region47: #{tpu_custom_call.1} parent=31 // pred_fallthru
                _
              // Predicated region
              $region55: #{tpu_custom_call.1} parent=31 // pred_check
                _
              $region56: #{tpu_custom_call.1} parent=31 // pred_check_branch
                %271 = sbr.rel target = $region58
              $region57: #{tpu_custom_call.1} parent=31 // pred_region
                _
              $region58: #{tpu_custom_call.1} parent=31 // pred_fallthru
                _
            $region32: #{tpu_custom_call.1} parent=27 // pred_fallthru
              _
            // Predicated region
            $region33: #{tpu_custom_call.1} parent=27 // pred_check
              _
            $region34: #{tpu_custom_call.1} parent=27 // pred_check_branch
              %233 = sbr.rel target = $region36
            $region35: #{tpu_custom_call.1} parent=27 // pred_region
              %s235 = ssub.s32 256, 1
              loop: start=0, step=1, limit=1
              $region37: #{tpu_custom_call.1} parent=35 // loop_pre_header
                _
              $region38: #{tpu_custom_call.1} parent=35 // loop_header
                %s237 = sphi 0, %s241
                %p238 = scmp.ge.s32.totalorder %s237, 1
                %s242 = sphi %s227, %s227
                %s243 = sphi %s223, %s223
              $region39: #{tpu_custom_call.1} parent=35 // loop_header_branch
                %240 = sbr.rel (%p238) target = $region43
              $region40: #{tpu_custom_call.1} parent=35 // loop_body
                %v244 = vld [vmem:[%s242] sm:%s235]
                %245 = vst [vmem:[%s243] sm:%s235] %v244
                %v246 = vld [vmem:[%s242 + $0x10] sm:%s235]
                %247 = vst [vmem:[%s243 + $0x8] sm:%s235] %v246
                %v248 = vld [vmem:[%s242 + $0x20] sm:%s235]
                %249 = vst [vmem:[%s243 + $0x10] sm:%s235] %v248
                %v250 = vld [vmem:[%s242 + $0x30] sm:%s235]
                %251 = vst [vmem:[%s243 + $0x18] sm:%s235] %v250
              $region41: #{tpu_custom_call.1} parent=35 // loop_footer
                %s241 = sadd.s32 1, %s237
              $region42: #{tpu_custom_call.1} parent=35 // loop_footer_branch
                %236 = sbr.rel target = $region38
              $region43: #{tpu_custom_call.1} parent=35 // loop_exit
                _
            $region36: #{tpu_custom_call.1} parent=27 // pred_fallthru
              _
          $region28: #{tpu_custom_call.1} parent=23 // pred_fallthru
            _
          %272 = vnop
        $region24: #{tpu_custom_call.1} parent=19 // pred_fallthru
          _
        // Predicated region
        $region59: #{tpu_custom_call.1} parent=19 // pred_check
          %p273 = pneg %p84
        $region60: #{tpu_custom_call.1} parent=19 // pred_check_branch
          %275 = sbr.rel (%p273) target = $region62
        $region61: #{tpu_custom_call.1} parent=19 // pred_region
          %s276 = smul.u32 16, %s23
          %p277 = scmp.lt.s32.totalorder %s22, 1
          %s278 = scalar_select %p277, %s22, 1
          %p279 = scmp.lt.s32.totalorder %s276, 31
          %s280 = scalar_select %p279, %s276, 31
          %s281 = smul.addr %s278, 32
          %s282 = sadd.s32 %s280, %s281
          %s283 = smul.addr %s282, 8
          %s284 = scalar_lea.vmem %s1, %s283
          %s285 = smul.u32 16, %s23
        $region62: #{tpu_custom_call.1} parent=19 // pred_fallthru
          _
        // Predicated region
        $region63: #{tpu_custom_call.1} parent=19 // pred_check
          %p286 = pneg %p112
        $region64: #{tpu_custom_call.1} parent=19 // pred_check_branch
          %288 = sbr.rel (%p286) target = $region66
        $region65: #{tpu_custom_call.1} parent=19 // pred_region
          %p289 = scmp.lt.s32.totalorder %s22, 1
          %s290 = scalar_select %p289, %s22, 1
          %p291 = scmp.lt.s32.totalorder %s24, 1
          %s292 = scalar_select %p291, %s24, 1
          %s293 = smul.addr %s290, 2
          %s294 = sadd.s32 %s292, %s293
          %s295 = smul.addr %s294, 8
          %s296 = scalar_lea.vmem %s2, %s295
        $region66: #{tpu_custom_call.1} parent=19 // pred_fallthru
          _
        // Predicated region
        $region67: #{tpu_custom_call.1} parent=19 // pred_check
          %p297 = pneg %p140
        $region68: #{tpu_custom_call.1} parent=19 // pred_check_branch
          %299 = sbr.rel (%p297) target = $region70
        $region69: #{tpu_custom_call.1} parent=19 // pred_region
          %s300 = smul.u32 16, %s24
          %p301 = scmp.lt.s32.totalorder %s22, 1
          %s302 = scalar_select %p301, %s22, 1
          %p303 = scmp.lt.s32.totalorder %s300, 31
          %s304 = scalar_select %p303, %s300, 31
          %s305 = smul.addr %s302, 32
          %s306 = sadd.s32 %s304, %s305
          %s307 = smul.addr %s306, 8
          %s308 = scalar_lea.vmem %s3, %s307
          %s309 = smul.u32 16, %s24
        $region70: #{tpu_custom_call.1} parent=19 // pred_fallthru
          _
      $region20: #{tpu_custom_call.1} parent=5 // pred_fallthru
        _
      %p310 = scmp.le.s32.totalorder 1, %s15
      %p311 = scmp.lt.s32.totalorder %s15, 9
      %p312 = pnand %p310, %p311
      %p313 = pneg %p312
      // Predicated region
      $region71: #{tpu_custom_call.1} parent=5 // pred_check
        _
      $region72: #{tpu_custom_call.1} parent=5 // pred_check_branch
        %315 = sbr.rel (%p312) target = $region74
      $region73: #{tpu_custom_call.1} parent=5 // pred_region
        %s316 = ssub.s32 %s15, 1
        %s317 = sand.u32 %s49, 1
        %s318 = sand.u32 %s49, 1
        %s319 = smul.addr %s318, 32
        %s320 = scalar_lea.vmem [#allocation6], %s319
        // Predicated region
        $region75: #{tpu_custom_call.1} parent=73 // pred_check
          %p321 = pneg %p62
        $region76: #{tpu_custom_call.1} parent=73 // pred_check_branch
          %323 = sbr.rel (%p321) target = $region78
        $region77: #{tpu_custom_call.1} parent=73 // pred_region
          _
        $region78: #{tpu_custom_call.1} parent=73 // pred_fallthru
          _
        %s324 = sand.u32 %s49, 1
        %s325 = sand.u32 %s49, 1
        %s326 = smul.addr %s325, 32
        %s327 = scalar_lea.vmem [#allocation6], %s326
        %p328 = pneg %p62
        %p329 = pneg %p59
        %s330 = smul.u32 16, %s26
        %p331 = scmp.lt.s32.totalorder %s25, 1
        %s332 = scalar_select %p331, %s25, 1
        %p333 = scmp.lt.s32.totalorder %s330, 31
        %s334 = scalar_select %p333, %s330, 31
        %s335 = smul.addr %s332, 32
        %s336 = sadd.s32 %s334, %s335
        %s337 = smul.addr %s336, 8
        %s338 = scalar_lea.vmem %s1, %s337
        %p339 = pneg %p90
        %p340 = pneg %p87
        %p341 = scmp.lt.s32.totalorder %s25, 1
        %s342 = scalar_select %p341, %s25, 1
        %p343 = scmp.lt.s32.totalorder %s27, 1
        %s344 = scalar_select %p343, %s27, 1
        %s345 = smul.addr %s342, 2
        %s346 = sadd.s32 %s344, %s345
        %s347 = smul.addr %s346, 8
        %s348 = scalar_lea.vmem %s2, %s347
        %p349 = pneg %p118
        %p350 = pneg %p115
        %s351 = smul.u32 16, %s27
        %p352 = scmp.lt.s32.totalorder %s25, 1
        %s353 = scalar_select %p352, %s25, 1
        %p354 = scmp.lt.s32.totalorder %s351, 31
        %s355 = scalar_select %p354, %s351, 31
        %s356 = smul.addr %s353, 32
        %s357 = sadd.s32 %s355, %s356
        %s358 = smul.addr %s357, 8
        %s359 = scalar_lea.vmem %s3, %s358
        %p360 = pneg %p146
        %p361 = pneg %p143
        %p362 = pneg %p167
        %p363 = pneg %p164
        %p364 = pneg %p195
        %p365 = pneg %p192
        %s366 = sand.u32 %s182, 1
        %s367 = scalar_lea.sflag [#allocation8], %s366
        %s368 = sand.u32 %s182, 1
        %s369 = smul.addr %s368, 32
        %s370 = scalar_lea.vmem [#allocation7], %s369
        %s371 = smul.u32 16, %s26
        %p372 = scmp.lt.s32.totalorder %s25, 1
        %s373 = scalar_select %p372, %s25, 1
        %p374 = scmp.lt.s32.totalorder %s371, 31
        %s375 = scalar_select %p374, %s371, 31
        %s376 = smul.addr %s373, 32
        %s377 = sadd.s32 %s375, %s376
        %s378 = smul.addr %s377, 8
        %s379 = scalar_lea.vmem %s1, %s378
        %s380 = smul.u32 16, %s26
        %p381 = scmp.lt.s32.totalorder %s25, 1
        %s382 = scalar_select %p381, %s25, 1
        %p383 = scmp.lt.s32.totalorder %s27, 1
        %s384 = scalar_select %p383, %s27, 1
        %s385 = smul.addr %s382, 2
        %s386 = sadd.s32 %s384, %s385
        %s387 = smul.addr %s386, 8
        %s388 = scalar_lea.vmem %s2, %s387
        %s389 = smul.u32 16, %s27
        %p390 = scmp.lt.s32.totalorder %s25, 1
        %s391 = scalar_select %p390, %s25, 1
        %p392 = scmp.lt.s32.totalorder %s389, 31
        %s393 = scalar_select %p392, %s389, 31
        %s394 = smul.addr %s391, 32
        %s395 = sadd.s32 %s393, %s394
        %s396 = smul.addr %s395, 8
        %s397 = scalar_lea.vmem %s3, %s396
        %s398 = smul.u32 16, %s27
        %p399 = scmp.eq.s32.totalorder %s27, 0
        // Predicated region
        $region79: #{tpu_custom_call.1} parent=73 // pred_check
          %p400 = pneg %p399
        $region80: #{tpu_custom_call.1} parent=73 // pred_check_branch
          %402 = sbr.rel (%p400) target = $region82
        $region81: #{tpu_custom_call.1} parent=73 // pred_region
          %vm403 = vcmask 261120
          %404 = vst.msk [vmem:[#allocation2] sm:$0xff] %vm403, 0.0
          %405 = vst.msk [vmem:[#allocation2 + $0x8] sm:$0xff] %vm403, 0.0
          %406 = vst.msk [vmem:[#allocation2 + $0x10] sm:$0xff] %vm403, 0.0
          %407 = vst.msk [vmem:[#allocation2 + $0x18] sm:$0xff] %vm403, 0.0
          %408 = vst.msk [vmem:[#allocation2 + $0x20] sm:$0xff] %vm403, 0.0
          %409 = vst.msk [vmem:[#allocation2 + $0x28] sm:$0xff] %vm403, 0.0
          %410 = vst.msk [vmem:[#allocation2 + $0x30] sm:$0xff] %vm403, 0.0
          %411 = vst.msk [vmem:[#allocation2 + $0x38] sm:$0xff] %vm403, 0.0
          %412 = vst.msk [vmem:[#allocation2 + $0x40] sm:$0xff] %vm403, 0.0
          %413 = vst.msk [vmem:[#allocation2 + $0x48] sm:$0xff] %vm403, 0.0
          %414 = vst.msk [vmem:[#allocation2 + $0x50] sm:$0xff] %vm403, 0.0
          %415 = vst.msk [vmem:[#allocation2 + $0x58] sm:$0xff] %vm403, 0.0
          %416 = vst.msk [vmem:[#allocation2 + $0x60] sm:$0xff] %vm403, 0.0
          %417 = vst.msk [vmem:[#allocation2 + $0x68] sm:$0xff] %vm403, 0.0
          %418 = vst.msk [vmem:[#allocation2 + $0x70] sm:$0xff] %vm403, 0.0
          %419 = vst.msk [vmem:[#allocation2 + $0x78] sm:$0xff] %vm403, 0.0
          %vm420 = vcmask 7168
          %421 = vst.msk [vmem:[#allocation3] sm:$0xff] %vm420, -inf
          %422 = vst.msk [vmem:[#allocation3 + $0x8] sm:$0xff] %vm420, -inf
          %423 = vst.msk [vmem:[#allocation3 + $0x10] sm:$0xff] %vm420, -inf
          %424 = vst.msk [vmem:[#allocation3 + $0x18] sm:$0xff] %vm420, -inf
          %425 = vst.msk [vmem:[#allocation3 + $0x20] sm:$0xff] %vm420, -inf
          %426 = vst.msk [vmem:[#allocation3 + $0x28] sm:$0xff] %vm420, -inf
          %427 = vst.msk [vmem:[#allocation3 + $0x30] sm:$0xff] %vm420, -inf
          %428 = vst.msk [vmem:[#allocation3 + $0x38] sm:$0xff] %vm420, -inf
          %429 = vst.msk [vmem:[#allocation3 + $0x40] sm:$0xff] %vm420, -inf
          %430 = vst.msk [vmem:[#allocation3 + $0x48] sm:$0xff] %vm420, -inf
          %431 = vst.msk [vmem:[#allocation3 + $0x50] sm:$0xff] %vm420, -inf
          %432 = vst.msk [vmem:[#allocation3 + $0x58] sm:$0xff] %vm420, -inf
          %433 = vst.msk [vmem:[#allocation3 + $0x60] sm:$0xff] %vm420, -inf
          %434 = vst.msk [vmem:[#allocation3 + $0x68] sm:$0xff] %vm420, -inf
          %435 = vst.msk [vmem:[#allocation3 + $0x70] sm:$0xff] %vm420, -inf
          %436 = vst.msk [vmem:[#allocation3 + $0x78] sm:$0xff] %vm420, -inf
          %437 = vst.msk [vmem:[#allocation4] sm:$0xff] %vm420, 0.0
          %438 = vst.msk [vmem:[#allocation4 + $0x8] sm:$0xff] %vm420, 0.0
          %439 = vst.msk [vmem:[#allocation4 + $0x10] sm:$0xff] %vm420, 0.0
          %440 = vst.msk [vmem:[#allocation4 + $0x18] sm:$0xff] %vm420, 0.0
          %441 = vst.msk [vmem:[#allocation4 + $0x20] sm:$0xff] %vm420, 0.0
          %442 = vst.msk [vmem:[#allocation4 + $0x28] sm:$0xff] %vm420, 0.0
          %443 = vst.msk [vmem:[#allocation4 + $0x30] sm:$0xff] %vm420, 0.0
          %444 = vst.msk [vmem:[#allocation4 + $0x38] sm:$0xff] %vm420, 0.0
          %445 = vst.msk [vmem:[#allocation4 + $0x40] sm:$0xff] %vm420, 0.0
          %446 = vst.msk [vmem:[#allocation4 + $0x48] sm:$0xff] %vm420, 0.0
          %447 = vst.msk [vmem:[#allocation4 + $0x50] sm:$0xff] %vm420, 0.0
          %448 = vst.msk [vmem:[#allocation4 + $0x58] sm:$0xff] %vm420, 0.0
          %449 = vst.msk [vmem:[#allocation4 + $0x60] sm:$0xff] %vm420, 0.0
          %450 = vst.msk [vmem:[#allocation4 + $0x68] sm:$0xff] %vm420, 0.0
          %451 = vst.msk [vmem:[#allocation4 + $0x70] sm:$0xff] %vm420, 0.0
          %452 = vst.msk [vmem:[#allocation4 + $0x78] sm:$0xff] %vm420, 0.0
        $region82: #{tpu_custom_call.1} parent=73 // pred_fallthru
          _
        %v453 = vld [vmem:[%s379] sm:$0xff]
        %v454 = vld [vmem:[%s379 + $0x8] sm:$0xff]
        %v455 = vld [vmem:[%s379 + $0x10] sm:$0xff]
        %v456 = vld [vmem:[%s379 + $0x18] sm:$0xff]
        %v457 = vld [vmem:[%s379 + $0x20] sm:$0xff]
        %v458 = vld [vmem:[%s379 + $0x28] sm:$0xff]
        %v459 = vld [vmem:[%s379 + $0x30] sm:$0xff]
        %v460 = vld [vmem:[%s379 + $0x38] sm:$0xff]
        %v461 = vld [vmem:[%s379 + $0x40] sm:$0xff]
        %v462 = vld [vmem:[%s379 + $0x48] sm:$0xff]
        %v463 = vld [vmem:[%s379 + $0x50] sm:$0xff]
        %v464 = vld [vmem:[%s379 + $0x58] sm:$0xff]
        %v465 = vld [vmem:[%s379 + $0x60] sm:$0xff]
        %v466 = vld [vmem:[%s379 + $0x68] sm:$0xff]
        %v467 = vld [vmem:[%s379 + $0x70] sm:$0xff]
        %v468 = vld [vmem:[%s379 + $0x78] sm:$0xff]
        %v469 = vld [vmem:[%s388] sm:$0xff]
        %v470 = vld [vmem:[%s397] sm:$0xff]
        %v471 = vld [vmem:[%s397 + $0x8] sm:$0xff]
        %v472 = vld [vmem:[%s397 + $0x10] sm:$0xff]
        %v473 = vld [vmem:[%s397 + $0x18] sm:$0xff]
        %v474 = vld [vmem:[%s397 + $0x20] sm:$0xff]
        %v475 = vld [vmem:[%s397 + $0x28] sm:$0xff]
        %v476 = vld [vmem:[%s397 + $0x30] sm:$0xff]
        %v477 = vld [vmem:[%s397 + $0x38] sm:$0xff]
        %v478 = vld [vmem:[%s397 + $0x40] sm:$0xff]
        %v479 = vld [vmem:[%s397 + $0x48] sm:$0xff]
        %v480 = vld [vmem:[%s397 + $0x50] sm:$0xff]
        %v481 = vld [vmem:[%s397 + $0x58] sm:$0xff]
        %v482 = vld [vmem:[%s397 + $0x60] sm:$0xff]
        %v483 = vld [vmem:[%s397 + $0x68] sm:$0xff]
        %v484 = vld [vmem:[%s397 + $0x70] sm:$0xff]
        %v485 = vld [vmem:[%s397 + $0x78] sm:$0xff]
        %vm486 = vcmask 64512
        %v488 = vsel %vm486, %v453, 0
        %v491 = vsel %vm486, %v454, 0
        %v494 = vsel %vm486, %v455, 0
        %v497 = vsel %vm486, %v456, 0
        %v500 = vsel %vm486, %v457, 0
        %v503 = vsel %vm486, %v458, 0
        %v506 = vsel %vm486, %v459, 0
        %v509 = vsel %vm486, %v460, 0
        %v512 = vsel %vm486, %v461, 0
        %v515 = vsel %vm486, %v462, 0
        %v518 = vsel %vm486, %v463, 0
        %v521 = vsel %vm486, %v464, 0
        %v524 = vsel %vm486, %v465, 0
        %v527 = vsel %vm486, %v466, 0
        %v530 = vsel %vm486, %v467, 0
        %v533 = vsel %vm486, %v468, 0
        %535 = vmatprep.subr.mxu0 0.0
        %536 = vmatpush1.msra.mxu0 0.0
        %537 = vmatprep.subr.mxu0 0.0
        %538 = vmatpush1.msra.mxu0 0.0
        %539 = vmatprep.subr.mxu0 0.0
        %540 = vmatpush1.msra.mxu0 0.0
        %541 = vmatprep.subr.mxu0 0.0
        %542 = vmatpush1.msra.mxu0 0.0
        %543 = vmatprep.subr.mxu0 0.0
        %544 = vmatpush1.msra.mxu0 0.0
        %545 = vmatprep.subr.mxu0 0.0
        %546 = vmatpush1.msra.mxu0 0.0
        %547 = vmatprep.subr.mxu0 0.0
        %548 = vmatpush1.msra.mxu0 0.0
        %549 = vmatprep.subr.mxu0 0.0
        %550 = vmatpush1.msra.mxu0 0.0
        %551 = vmatprep.subr.mxu0 0.0
        %552 = vmatpush1.msra.mxu0 0.0
        %553 = vmatprep.subr.mxu0 0.0
        %554 = vmatpush1.msra.mxu0 0.0
        %555 = vmatprep.subr.mxu0 0.0
        %556 = vmatpush1.msra.mxu0 0.0
        %557 = vmatprep.subr.mxu0 0.0
        %558 = vmatpush1.msra.mxu0 0.0
        %559 = vmatprep.subr.mxu0 0.0
        %560 = vmatpush1.msra.mxu0 0.0
        %561 = vmatprep.subr.mxu0 0.0
        %562 = vmatpush1.msra.mxu0 0.0
        %563 = vmatprep.subr.mxu0 0.0
        %564 = vmatpush1.msra.mxu0 0.0
        %565 = vmatprep.subr.mxu0 0.0
        %566 = vmatpush1.msra.mxu0 %v469
        %567 = vmatprep.subr.mxu0 0.0
        %568 = vmatpush2.msra.mxu0 0.0
        %569 = vmatprep.subr.mxu0 0.0
        %570 = vmatpush2.msra.mxu0 0.0
        %571 = vmatprep.subr.mxu0 0.0
        %572 = vmatpush2.msra.mxu0 0.0
        %573 = vmatprep.subr.mxu0 0.0
        %574 = vmatpush2.msra.mxu0 0.0
        %575 = vmatprep.subr.mxu0 0.0
        %576 = vmatpush2.msra.mxu0 0.0
        %577 = vmatprep.subr.mxu0 0.0
        %578 = vmatpush2.msra.mxu0 0.0
        %579 = vmatprep.subr.mxu0 0.0
        %580 = vmatpush2.msra.mxu0 0.0
        %581 = vmatprep.subr.mxu0 0.0
        %582 = vmatpush2.msra.mxu0 0.0
        %583 = vmatprep.subr.mxu0 0.0
        %584 = vmatpush2.msra.mxu0 0.0
        %585 = vmatprep.subr.mxu0 0.0
        %586 = vmatpush2.msra.mxu0 0.0
        %587 = vmatprep.subr.mxu0 0.0
        %588 = vmatpush2.msra.mxu0 0.0
        %589 = vmatprep.subr.mxu0 0.0
        %590 = vmatpush2.msra.mxu0 0.0
        %591 = vmatprep.subr.mxu0 0.0
        %592 = vmatpush2.msra.mxu0 0.0
        %593 = vmatprep.subr.mxu0 0.0
        %594 = vmatpush2.msra.mxu0 0.0
        %595 = vmatprep.subr.mxu0 0.0
        %596 = vmatpush2.msra.mxu0 0.0
        %597 = vmatprep.subr.mxu0 0.0
        %598 = vmatpush2.msra.mxu0 0.0
        %599 = vmatprep.mubr.f32.mxu0 0.0
        %600 = vmatmul.mubr.f32.gmra.mxu0 %v488
        %v601 = vpop.f32.mrf.mxu0
        %v602 = vadd.f32 0.0, %v601
        %v603 = vpop.f32.mrf.mxu0
        %604 = vmatprep.mubr.f32.mxu0 0.0
        %605 = vmatmul.mubr.f32.gmra.mxu0 %v491
        %v606 = vpop.f32.mrf.mxu0
        %v607 = vadd.f32 0.0, %v606
        %v608 = vpop.f32.mrf.mxu0
        %609 = vmatprep.mubr.f32.mxu0 0.0
        %610 = vmatmul.mubr.f32.gmra.mxu0 %v494
        %v611 = vpop.f32.mrf.mxu0
        %v612 = vadd.f32 0.0, %v611
        %v613 = vpop.f32.mrf.mxu0
        %614 = vmatprep.mubr.f32.mxu0 0.0
        %615 = vmatmul.mubr.f32.gmra.mxu0 %v497
        %v616 = vpop.f32.mrf.mxu0
        %v617 = vadd.f32 0.0, %v616
        %v618 = vpop.f32.mrf.mxu0
        %619 = vmatprep.mubr.f32.mxu0 0.0
        %620 = vmatmul.mubr.f32.gmra.mxu0 %v500
        %v621 = vpop.f32.mrf.mxu0
        %v622 = vadd.f32 0.0, %v621
        %v623 = vpop.f32.mrf.mxu0
        %624 = vmatprep.mubr.f32.mxu0 0.0
        %625 = vmatmul.mubr.f32.gmra.mxu0 %v503
        %v626 = vpop.f32.mrf.mxu0
        %v627 = vadd.f32 0.0, %v626
        %v628 = vpop.f32.mrf.mxu0
        %629 = vmatprep.mubr.f32.mxu0 0.0
        %630 = vmatmul.mubr.f32.gmra.mxu0 %v506
        %v631 = vpop.f32.mrf.mxu0
        %v632 = vadd.f32 0.0, %v631
        %v633 = vpop.f32.mrf.mxu0
        %634 = vmatprep.mubr.f32.mxu0 0.0
        %635 = vmatmul.mubr.f32.gmra.mxu0 %v509
        %v636 = vpop.f32.mrf.mxu0
        %v637 = vadd.f32 0.0, %v636
        %v638 = vpop.f32.mrf.mxu0
        %639 = vmatprep.mubr.f32.mxu0 0.0
        %640 = vmatmul.mubr.f32.gmra.mxu0 %v512
        %v641 = vpop.f32.mrf.mxu0
        %v642 = vadd.f32 0.0, %v641
        %v643 = vpop.f32.mrf.mxu0
        %644 = vmatprep.mubr.f32.mxu0 0.0
        %645 = vmatmul.mubr.f32.gmra.mxu0 %v515
        %v646 = vpop.f32.mrf.mxu0
        %v647 = vadd.f32 0.0, %v646
        %v648 = vpop.f32.mrf.mxu0
        %649 = vmatprep.mubr.f32.mxu0 0.0
        %650 = vmatmul.mubr.f32.gmra.mxu0 %v518
        %v651 = vpop.f32.mrf.mxu0
        %v652 = vadd.f32 0.0, %v651
        %v653 = vpop.f32.mrf.mxu0
        %654 = vmatprep.mubr.f32.mxu0 0.0
        %655 = vmatmul.mubr.f32.gmra.mxu0 %v521
        %v656 = vpop.f32.mrf.mxu0
        %v657 = vadd.f32 0.0, %v656
        %v658 = vpop.f32.mrf.mxu0
        %659 = vmatprep.mubr.f32.mxu0 0.0
        %660 = vmatmul.mubr.f32.gmra.mxu0 %v524
        %v661 = vpop.f32.mrf.mxu0
        %v662 = vadd.f32 0.0, %v661
        %v663 = vpop.f32.mrf.mxu0
        %664 = vmatprep.mubr.f32.mxu0 0.0
        %665 = vmatmul.mubr.f32.gmra.mxu0 %v527
        %v666 = vpop.f32.mrf.mxu0
        %v667 = vadd.f32 0.0, %v666
        %v668 = vpop.f32.mrf.mxu0
        %669 = vmatprep.mubr.f32.mxu0 0.0
        %670 = vmatmul.mubr.f32.gmra.mxu0 %v530
        %v671 = vpop.f32.mrf.mxu0
        %v672 = vadd.f32 0.0, %v671
        %v673 = vpop.f32.mrf.mxu0
        %674 = vmatprep.mubr.f32.mxu0 0.0
        %675 = vmatmul.mubr.f32.gmra.mxu0 %v533
        %v676 = vpop.f32.mrf.mxu0
        %v677 = vadd.f32 0.0, %v676
        %v678 = vpop.f32.mrf.mxu0
        %679 = vdwg.mxu0
        %v680 = vld [vmem:[#allocation3] sm:$0xff]
        %v681 = vld [vmem:[#allocation3 + $0x8] sm:$0xff]
        %v682 = vld [vmem:[#allocation3 + $0x10] sm:$0xff]
        %v683 = vld [vmem:[#allocation3 + $0x18] sm:$0xff]
        %v684 = vld [vmem:[#allocation3 + $0x20] sm:$0xff]
        %v685 = vld [vmem:[#allocation3 + $0x28] sm:$0xff]
        %v686 = vld [vmem:[#allocation3 + $0x30] sm:$0xff]
        %v687 = vld [vmem:[#allocation3 + $0x38] sm:$0xff]
        %v688 = vld [vmem:[#allocation3 + $0x40] sm:$0xff]
        %v689 = vld [vmem:[#allocation3 + $0x48] sm:$0xff]
        %v690 = vld [vmem:[#allocation3 + $0x50] sm:$0xff]
        %v691 = vld [vmem:[#allocation3 + $0x58] sm:$0xff]
        %v692 = vld [vmem:[#allocation3 + $0x60] sm:$0xff]
        %v693 = vld [vmem:[#allocation3 + $0x68] sm:$0xff]
        %v694 = vld [vmem:[#allocation3 + $0x70] sm:$0xff]
        %v695 = vld [vmem:[#allocation3 + $0x78] sm:$0xff]
        %696 = vmax.xlane.f32.xlu0 %v602
        %v697 = vpop.xlane.xlu0 %696
        %698 = vmax.xlane.f32.xlu0 %v607
        %v699 = vpop.xlane.xlu0 %698
        %700 = vmax.xlane.f32.xlu0 %v612
        %v701 = vpop.xlane.xlu0 %700
        %702 = vmax.xlane.f32.xlu0 %v617
        %v703 = vpop.xlane.xlu0 %702
        %704 = vmax.xlane.f32.xlu0 %v622
        %v705 = vpop.xlane.xlu0 %704
        %706 = vmax.xlane.f32.xlu0 %v627
        %v707 = vpop.xlane.xlu0 %706
        %708 = vmax.xlane.f32.xlu0 %v632
        %v709 = vpop.xlane.xlu0 %708
        %710 = vmax.xlane.f32.xlu0 %v637
        %v711 = vpop.xlane.xlu0 %710
        %712 = vmax.xlane.f32.xlu0 %v642
        %v713 = vpop.xlane.xlu0 %712
        %714 = vmax.xlane.f32.xlu0 %v647
        %v715 = vpop.xlane.xlu0 %714
        %716 = vmax.xlane.f32.xlu0 %v652
        %v717 = vpop.xlane.xlu0 %716
        %718 = vmax.xlane.f32.xlu0 %v657
        %v719 = vpop.xlane.xlu0 %718
        %720 = vmax.xlane.f32.xlu0 %v662
        %v721 = vpop.xlane.xlu0 %720
        %722 = vmax.xlane.f32.xlu0 %v667
        %v723 = vpop.xlane.xlu0 %722
        %724 = vmax.xlane.f32.xlu0 %v672
        %v725 = vpop.xlane.xlu0 %724
        %726 = vmax.xlane.f32.xlu0 %v677
        %v727 = vpop.xlane.xlu0 %726
        %v728 = vmax.f32 %v680, %v697
        %v729 = vmax.f32 %v681, %v699
        %v730 = vmax.f32 %v682, %v701
        %v731 = vmax.f32 %v683, %v703
        %v732 = vmax.f32 %v684, %v705
        %v733 = vmax.f32 %v685, %v707
        %v734 = vmax.f32 %v686, %v709
        %v735 = vmax.f32 %v687, %v711
        %v736 = vmax.f32 %v688, %v713
        %v737 = vmax.f32 %v689, %v715
        %v738 = vmax.f32 %v690, %v717
        %v739 = vmax.f32 %v691, %v719
        %v740 = vmax.f32 %v692, %v721
        %v741 = vmax.f32 %v693, %v723
        %v742 = vmax.f32 %v694, %v725
        %v743 = vmax.f32 %v695, %v727
        %v744 = vsub.f32 %v680, %v728
        %v745 = vsub.f32 %v681, %v729
        %v746 = vsub.f32 %v682, %v730
        %v747 = vsub.f32 %v683, %v731
        %v748 = vsub.f32 %v684, %v732
        %v749 = vsub.f32 %v685, %v733
        %v750 = vsub.f32 %v686, %v734
        %v751 = vsub.f32 %v687, %v735
        %v752 = vsub.f32 %v688, %v736
        %v753 = vsub.f32 %v689, %v737
        %v754 = vsub.f32 %v690, %v738
        %v755 = vsub.f32 %v691, %v739
        %v756 = vsub.f32 %v692, %v740
        %v757 = vsub.f32 %v693, %v741
        %v758 = vsub.f32 %v694, %v742
        %v759 = vsub.f32 %v695, %v743
        %v760 = vmul.f32 %v744, 1.442695
        %v761 = vpow.pop %v760
        %v762 = vmul.f32 %v745, 1.442695
        %v763 = vpow.pop %v762
        %v764 = vmul.f32 %v746, 1.442695
        %v765 = vpow.pop %v764
        %v766 = vmul.f32 %v747, 1.442695
        %v767 = vpow.pop %v766
        %v768 = vmul.f32 %v748, 1.442695
        %v769 = vpow.pop %v768
        %v770 = vmul.f32 %v749, 1.442695
        %v771 = vpow.pop %v770
        %v772 = vmul.f32 %v750, 1.442695
        %v773 = vpow.pop %v772
        %v774 = vmul.f32 %v751, 1.442695
        %v775 = vpow.pop %v774
        %v776 = vmul.f32 %v752, 1.442695
        %v777 = vpow.pop %v776
        %v778 = vmul.f32 %v753, 1.442695
        %v779 = vpow.pop %v778
        %v780 = vmul.f32 %v754, 1.442695
        %v781 = vpow.pop %v780
        %v782 = vmul.f32 %v755, 1.442695
        %v783 = vpow.pop %v782
        %v784 = vmul.f32 %v756, 1.442695
        %v785 = vpow.pop %v784
        %v786 = vmul.f32 %v757, 1.442695
        %v787 = vpow.pop %v786
        %v788 = vmul.f32 %v758, 1.442695
        %v789 = vpow.pop %v788
        %v790 = vmul.f32 %v759, 1.442695
        %v791 = vpow.pop %v790
        %793 = vset.pattern.permute.xlu0 0
        %794 = vperm.xlu0 %793, %v728
        %v795 = vpop.permute.xlu0 %794
        %798 = vset.pattern.permute.xlu0 0
        %799 = vperm.xlu0 %798, %v729
        %v800 = vpop.permute.xlu0 %799
        %803 = vset.pattern.permute.xlu0 0
        %804 = vperm.xlu0 %803, %v730
        %v805 = vpop.permute.xlu0 %804
        %808 = vset.pattern.permute.xlu0 0
        %809 = vperm.xlu0 %808, %v731
        %v810 = vpop.permute.xlu0 %809
        %813 = vset.pattern.permute.xlu0 0
        %814 = vperm.xlu0 %813, %v732
        %v815 = vpop.permute.xlu0 %814
        %818 = vset.pattern.permute.xlu0 0
        %819 = vperm.xlu0 %818, %v733
        %v820 = vpop.permute.xlu0 %819
        %823 = vset.pattern.permute.xlu0 0
        %824 = vperm.xlu0 %823, %v734
        %v825 = vpop.permute.xlu0 %824
        %828 = vset.pattern.permute.xlu0 0
        %829 = vperm.xlu0 %828, %v735
        %v830 = vpop.permute.xlu0 %829
        %833 = vset.pattern.permute.xlu0 0
        %834 = vperm.xlu0 %833, %v736
        %v835 = vpop.permute.xlu0 %834
        %838 = vset.pattern.permute.xlu0 0
        %839 = vperm.xlu0 %838, %v737
        %v840 = vpop.permute.xlu0 %839
        %843 = vset.pattern.permute.xlu0 0
        %844 = vperm.xlu0 %843, %v738
        %v845 = vpop.permute.xlu0 %844
        %848 = vset.pattern.permute.xlu0 0
        %849 = vperm.xlu0 %848, %v739
        %v850 = vpop.permute.xlu0 %849
        %853 = vset.pattern.permute.xlu0 0
        %854 = vperm.xlu0 %853, %v740
        %v855 = vpop.permute.xlu0 %854
        %858 = vset.pattern.permute.xlu0 0
        %859 = vperm.xlu0 %858, %v741
        %v860 = vpop.permute.xlu0 %859
        %863 = vset.pattern.permute.xlu0 0
        %864 = vperm.xlu0 %863, %v742
        %v865 = vpop.permute.xlu0 %864
        %868 = vset.pattern.permute.xlu0 0
        %869 = vperm.xlu0 %868, %v743
        %v870 = vpop.permute.xlu0 %869
        %v872 = vsub.f32 %v602, %v795
        %v873 = vsub.f32 %v607, %v800
        %v874 = vsub.f32 %v612, %v805
        %v875 = vsub.f32 %v617, %v810
        %v876 = vsub.f32 %v622, %v815
        %v877 = vsub.f32 %v627, %v820
        %v878 = vsub.f32 %v632, %v825
        %v879 = vsub.f32 %v637, %v830
        %v880 = vsub.f32 %v642, %v835
        %v881 = vsub.f32 %v647, %v840
        %v882 = vsub.f32 %v652, %v845
        %v883 = vsub.f32 %v657, %v850
        %v884 = vsub.f32 %v662, %v855
        %v885 = vsub.f32 %v667, %v860
        %v886 = vsub.f32 %v672, %v865
        %v887 = vsub.f32 %v677, %v870
        %v888 = vmul.f32 %v872, 1.442695
        %v889 = vpow.pop %v888
        %v890 = vmul.f32 %v873, 1.442695
        %v891 = vpow.pop %v890
        %v892 = vmul.f32 %v874, 1.442695
        %v893 = vpow.pop %v892
        %v894 = vmul.f32 %v875, 1.442695
        %v895 = vpow.pop %v894
        %v896 = vmul.f32 %v876, 1.442695
        %v897 = vpow.pop %v896
        %v898 = vmul.f32 %v877, 1.442695
        %v899 = vpow.pop %v898
        %v900 = vmul.f32 %v878, 1.442695
        %v901 = vpow.pop %v900
        %v902 = vmul.f32 %v879, 1.442695
        %v903 = vpow.pop %v902
        %v904 = vmul.f32 %v880, 1.442695
        %v905 = vpow.pop %v904
        %v906 = vmul.f32 %v881, 1.442695
        %v907 = vpow.pop %v906
        %v908 = vmul.f32 %v882, 1.442695
        %v909 = vpow.pop %v908
        %v910 = vmul.f32 %v883, 1.442695
        %v911 = vpow.pop %v910
        %v912 = vmul.f32 %v884, 1.442695
        %v913 = vpow.pop %v912
        %v914 = vmul.f32 %v885, 1.442695
        %v915 = vpow.pop %v914
        %v916 = vmul.f32 %v886, 1.442695
        %v917 = vpow.pop %v916
        %v918 = vmul.f32 %v887, 1.442695
        %v919 = vpow.pop %v918
        %v920 = vld [vmem:[#allocation4] sm:$0xff]
        %v921 = vld [vmem:[#allocation4 + $0x8] sm:$0xff]
        %v922 = vld [vmem:[#allocation4 + $0x10] sm:$0xff]
        %v923 = vld [vmem:[#allocation4 + $0x18] sm:$0xff]
        %v924 = vld [vmem:[#allocation4 + $0x20] sm:$0xff]
        %v925 = vld [vmem:[#allocation4 + $0x28] sm:$0xff]
        %v926 = vld [vmem:[#allocation4 + $0x30] sm:$0xff]
        %v927 = vld [vmem:[#allocation4 + $0x38] sm:$0xff]
        %v928 = vld [vmem:[#allocation4 + $0x40] sm:$0xff]
        %v929 = vld [vmem:[#allocation4 + $0x48] sm:$0xff]
        %v930 = vld [vmem:[#allocation4 + $0x50] sm:$0xff]
        %v931 = vld [vmem:[#allocation4 + $0x58] sm:$0xff]
        %v932 = vld [vmem:[#allocation4 + $0x60] sm:$0xff]
        %v933 = vld [vmem:[#allocation4 + $0x68] sm:$0xff]
        %v934 = vld [vmem:[#allocation4 + $0x70] sm:$0xff]
        %v935 = vld [vmem:[#allocation4 + $0x78] sm:$0xff]
        %v936 = vmul.f32 %v761, %v920
        %v937 = vmul.f32 %v763, %v921
        %v938 = vmul.f32 %v765, %v922
        %v939 = vmul.f32 %v767, %v923
        %v940 = vmul.f32 %v769, %v924
        %v941 = vmul.f32 %v771, %v925
        %v942 = vmul.f32 %v773, %v926
        %v943 = vmul.f32 %v775, %v927
        %v944 = vmul.f32 %v777, %v928
        %v945 = vmul.f32 %v779, %v929
        %v946 = vmul.f32 %v781, %v930
        %v947 = vmul.f32 %v783, %v931
        %v948 = vmul.f32 %v785, %v932
        %v949 = vmul.f32 %v787, %v933
        %v950 = vmul.f32 %v789, %v934
        %v951 = vmul.f32 %v791, %v935
        %952 = vadd.xlane.f32.xlu0 %v889
        %v953 = vpop.xlane.xlu0 %952
        %954 = vadd.xlane.f32.xlu0 %v891
        %v955 = vpop.xlane.xlu0 %954
        %956 = vadd.xlane.f32.xlu0 %v893
        %v957 = vpop.xlane.xlu0 %956
        %958 = vadd.xlane.f32.xlu0 %v895
        %v959 = vpop.xlane.xlu0 %958
        %960 = vadd.xlane.f32.xlu0 %v897
        %v961 = vpop.xlane.xlu0 %960
        %962 = vadd.xlane.f32.xlu0 %v899
        %v963 = vpop.xlane.xlu0 %962
        %964 = vadd.xlane.f32.xlu0 %v901
        %v965 = vpop.xlane.xlu0 %964
        %966 = vadd.xlane.f32.xlu0 %v903
        %v967 = vpop.xlane.xlu0 %966
        %968 = vadd.xlane.f32.xlu0 %v905
        %v969 = vpop.xlane.xlu0 %968
        %970 = vadd.xlane.f32.xlu0 %v907
        %v971 = vpop.xlane.xlu0 %970
        %972 = vadd.xlane.f32.xlu0 %v909
        %v973 = vpop.xlane.xlu0 %972
        %974 = vadd.xlane.f32.xlu0 %v911
        %v975 = vpop.xlane.xlu0 %974
        %976 = vadd.xlane.f32.xlu0 %v913
        %v977 = vpop.xlane.xlu0 %976
        %978 = vadd.xlane.f32.xlu0 %v915
        %v979 = vpop.xlane.xlu0 %978
        %980 = vadd.xlane.f32.xlu0 %v917
        %v981 = vpop.xlane.xlu0 %980
        %982 = vadd.xlane.f32.xlu0 %v919
        %v983 = vpop.xlane.xlu0 %982
        %v984 = vadd.f32 %v936, %v953
        %v985 = vadd.f32 %v937, %v955
        %v986 = vadd.f32 %v938, %v957
        %v987 = vadd.f32 %v939, %v959
        %v988 = vadd.f32 %v940, %v961
        %v989 = vadd.f32 %v941, %v963
        %v990 = vadd.f32 %v942, %v965
        %v991 = vadd.f32 %v943, %v967
        %v992 = vadd.f32 %v944, %v969
        %v993 = vadd.f32 %v945, %v971
        %v994 = vadd.f32 %v946, %v973
        %v995 = vadd.f32 %v947, %v975
        %v996 = vadd.f32 %v948, %v977
        %v997 = vadd.f32 %v949, %v979
        %v998 = vadd.f32 %v950, %v981
        %v999 = vadd.f32 %v951, %v983
        %vm1000 = vcmask 7168
        %1001 = vst.msk [vmem:[#allocation4] sm:$0xff] %vm1000, %v984
        %1002 = vst.msk [vmem:[#allocation4 + $0x8] sm:$0xff] %vm1000, %v985
        %1003 = vst.msk [vmem:[#allocation4 + $0x10] sm:$0xff] %vm1000, %v986
        %1004 = vst.msk [vmem:[#allocation4 + $0x18] sm:$0xff] %vm1000, %v987
        %1005 = vst.msk [vmem:[#allocation4 + $0x20] sm:$0xff] %vm1000, %v988
        %1006 = vst.msk [vmem:[#allocation4 + $0x28] sm:$0xff] %vm1000, %v989
        %1007 = vst.msk [vmem:[#allocation4 + $0x30] sm:$0xff] %vm1000, %v990
        %1008 = vst.msk [vmem:[#allocation4 + $0x38] sm:$0xff] %vm1000, %v991
        %1009 = vst.msk [vmem:[#allocation4 + $0x40] sm:$0xff] %vm1000, %v992
        %1010 = vst.msk [vmem:[#allocation4 + $0x48] sm:$0xff] %vm1000, %v993
        %1011 = vst.msk [vmem:[#allocation4 + $0x50] sm:$0xff] %vm1000, %v994
        %1012 = vst.msk [vmem:[#allocation4 + $0x58] sm:$0xff] %vm1000, %v995
        %1013 = vst.msk [vmem:[#allocation4 + $0x60] sm:$0xff] %vm1000, %v996
        %1014 = vst.msk [vmem:[#allocation4 + $0x68] sm:$0xff] %vm1000, %v997
        %1015 = vst.msk [vmem:[#allocation4 + $0x70] sm:$0xff] %vm1000, %v998
        %1016 = vst.msk [vmem:[#allocation4 + $0x78] sm:$0xff] %vm1000, %v999
        %v1017 = vld [vmem:[#allocation2] sm:$0xff]
        %v1018 = vld [vmem:[#allocation2 + $0x8] sm:$0xff]
        %v1019 = vld [vmem:[#allocation2 + $0x10] sm:$0xff]
        %v1020 = vld [vmem:[#allocation2 + $0x18] sm:$0xff]
        %v1021 = vld [vmem:[#allocation2 + $0x20] sm:$0xff]
        %v1022 = vld [vmem:[#allocation2 + $0x28] sm:$0xff]
        %v1023 = vld [vmem:[#allocation2 + $0x30] sm:$0xff]
        %v1024 = vld [vmem:[#allocation2 + $0x38] sm:$0xff]
        %v1025 = vld [vmem:[#allocation2 + $0x40] sm:$0xff]
        %v1026 = vld [vmem:[#allocation2 + $0x48] sm:$0xff]
        %v1027 = vld [vmem:[#allocation2 + $0x50] sm:$0xff]
        %v1028 = vld [vmem:[#allocation2 + $0x58] sm:$0xff]
        %v1029 = vld [vmem:[#allocation2 + $0x60] sm:$0xff]
        %v1030 = vld [vmem:[#allocation2 + $0x68] sm:$0xff]
        %v1031 = vld [vmem:[#allocation2 + $0x70] sm:$0xff]
        %v1032 = vld [vmem:[#allocation2 + $0x78] sm:$0xff]
        %1034 = vset.pattern.permute.xlu0 0
        %1035 = vperm.xlu0 %1034, %v761
        %v1036 = vpop.permute.xlu0 %1035
        %1039 = vset.pattern.permute.xlu0 0
        %1040 = vperm.xlu0 %1039, %v763
        %v1041 = vpop.permute.xlu0 %1040
        %1044 = vset.pattern.permute.xlu0 0
        %1045 = vperm.xlu0 %1044, %v765
        %v1046 = vpop.permute.xlu0 %1045
        %1049 = vset.pattern.permute.xlu0 0
        %1050 = vperm.xlu0 %1049, %v767
        %v1051 = vpop.permute.xlu0 %1050
        %1054 = vset.pattern.permute.xlu0 0
        %1055 = vperm.xlu0 %1054, %v769
        %v1056 = vpop.permute.xlu0 %1055
        %1059 = vset.pattern.permute.xlu0 0
        %1060 = vperm.xlu0 %1059, %v771
        %v1061 = vpop.permute.xlu0 %1060
        %1064 = vset.pattern.permute.xlu0 0
        %1065 = vperm.xlu0 %1064, %v773
        %v1066 = vpop.permute.xlu0 %1065
        %1069 = vset.pattern.permute.xlu0 0
        %1070 = vperm.xlu0 %1069, %v775
        %v1071 = vpop.permute.xlu0 %1070
        %1074 = vset.pattern.permute.xlu0 0
        %1075 = vperm.xlu0 %1074, %v777
        %v1076 = vpop.permute.xlu0 %1075
        %1079 = vset.pattern.permute.xlu0 0
        %1080 = vperm.xlu0 %1079, %v779
        %v1081 = vpop.permute.xlu0 %1080
        %1084 = vset.pattern.permute.xlu0 0
        %1085 = vperm.xlu0 %1084, %v781
        %v1086 = vpop.permute.xlu0 %1085
        %1089 = vset.pattern.permute.xlu0 0
        %1090 = vperm.xlu0 %1089, %v783
        %v1091 = vpop.permute.xlu0 %1090
        %1094 = vset.pattern.permute.xlu0 0
        %1095 = vperm.xlu0 %1094, %v785
        %v1096 = vpop.permute.xlu0 %1095
        %1099 = vset.pattern.permute.xlu0 0
        %1100 = vperm.xlu0 %1099, %v787
        %v1101 = vpop.permute.xlu0 %1100
        %1104 = vset.pattern.permute.xlu0 0
        %1105 = vperm.xlu0 %1104, %v789
        %v1106 = vpop.permute.xlu0 %1105
        %1109 = vset.pattern.permute.xlu0 0
        %1110 = vperm.xlu0 %1109, %v791
        %v1111 = vpop.permute.xlu0 %1110
        %v1113 = vmul.f32 %v1036, %v1017
        %v1114 = vmul.f32 %v1041, %v1018
        %v1115 = vmul.f32 %v1046, %v1019
        %v1116 = vmul.f32 %v1051, %v1020
        %v1117 = vmul.f32 %v1056, %v1021
        %v1118 = vmul.f32 %v1061, %v1022
        %v1119 = vmul.f32 %v1066, %v1023
        %v1120 = vmul.f32 %v1071, %v1024
        %v1121 = vmul.f32 %v1076, %v1025
        %v1122 = vmul.f32 %v1081, %v1026
        %v1123 = vmul.f32 %v1086, %v1027
        %v1124 = vmul.f32 %v1091, %v1028
        %v1125 = vmul.f32 %v1096, %v1029
        %v1126 = vmul.f32 %v1101, %v1030
        %v1127 = vmul.f32 %v1106, %v1031
        %v1128 = vmul.f32 %v1111, %v1032
        %1129 = vmatprep.subr.mxu0 0.0
        %1130 = vmatpush1.msra.mxu0 %v485
        %1131 = vmatprep.subr.mxu0 0.0
        %1132 = vmatpush1.msra.mxu0 %v484
        %1133 = vmatprep.subr.mxu0 0.0
        %1134 = vmatpush1.msra.mxu0 %v483
        %1135 = vmatprep.subr.mxu0 0.0
        %1136 = vmatpush1.msra.mxu0 %v482
        %1137 = vmatprep.subr.mxu0 0.0
        %1138 = vmatpush1.msra.mxu0 %v481
        %1139 = vmatprep.subr.mxu0 0.0
        %1140 = vmatpush1.msra.mxu0 %v480
        %1141 = vmatprep.subr.mxu0 0.0
        %1142 = vmatpush1.msra.mxu0 %v479
        %1143 = vmatprep.subr.mxu0 0.0
        %1144 = vmatpush1.msra.mxu0 %v478
        %1145 = vmatprep.subr.mxu0 0.0
        %1146 = vmatpush1.msra.mxu0 %v477
        %1147 = vmatprep.subr.mxu0 0.0
        %1148 = vmatpush1.msra.mxu0 %v476
        %1149 = vmatprep.subr.mxu0 0.0
        %1150 = vmatpush1.msra.mxu0 %v475
        %1151 = vmatprep.subr.mxu0 0.0
        %1152 = vmatpush1.msra.mxu0 %v474
        %1153 = vmatprep.subr.mxu0 0.0
        %1154 = vmatpush1.msra.mxu0 %v473
        %1155 = vmatprep.subr.mxu0 0.0
        %1156 = vmatpush1.msra.mxu0 %v472
        %1157 = vmatprep.subr.mxu0 0.0
        %1158 = vmatpush1.msra.mxu0 %v471
        %1159 = vmatprep.subr.mxu0 0.0
        %1160 = vmatpush1.msra.mxu0 %v470
        %1161 = vmatprep.subr.mxu0 0.0
        %1162 = vmatpush2.msra.mxu0 0.0
        %1163 = vmatprep.subr.mxu0 0.0
        %1164 = vmatpush2.msra.mxu0 0.0
        %1165 = vmatprep.subr.mxu0 0.0
        %1166 = vmatpush2.msra.mxu0 0.0
        %1167 = vmatprep.subr.mxu0 0.0
        %1168 = vmatpush2.msra.mxu0 0.0
        %1169 = vmatprep.subr.mxu0 0.0
        %1170 = vmatpush2.msra.mxu0 0.0
        %1171 = vmatprep.subr.mxu0 0.0
        %1172 = vmatpush2.msra.mxu0 0.0
        %1173 = vmatprep.subr.mxu0 0.0
        %1174 = vmatpush2.msra.mxu0 0.0
        %1175 = vmatprep.subr.mxu0 0.0
        %1176 = vmatpush2.msra.mxu0 0.0
        %1177 = vmatprep.subr.mxu0 0.0
        %1178 = vmatpush2.msra.mxu0 0.0
        %1179 = vmatprep.subr.mxu0 0.0
        %1180 = vmatpush2.msra.mxu0 0.0
        %1181 = vmatprep.subr.mxu0 0.0
        %1182 = vmatpush2.msra.mxu0 0.0
        %1183 = vmatprep.subr.mxu0 0.0
        %1184 = vmatpush2.msra.mxu0 0.0
        %1185 = vmatprep.subr.mxu0 0.0
        %1186 = vmatpush2.msra.mxu0 0.0
        %1187 = vmatprep.subr.mxu0 0.0
        %1188 = vmatpush2.msra.mxu0 0.0
        %1189 = vmatprep.subr.mxu0 0.0
        %1190 = vmatpush2.msra.mxu0 0.0
        %1191 = vmatprep.subr.mxu0 0.0
        %1192 = vmatpush2.msra.mxu0 0.0
        %1193 = vmatprep.mubr.f32.mxu0 0.0
        %1194 = vmatmul.mubr.f32.gmra.mxu0 %v889
        %v1195 = vpop.f32.mrf.mxu0
        %v1196 = vadd.f32 0.0, %v1195
        %v1197 = vpop.f32.mrf.mxu0
        %1198 = vmatprep.mubr.f32.mxu0 0.0
        %1199 = vmatmul.mubr.f32.gmra.mxu0 %v891
        %v1200 = vpop.f32.mrf.mxu0
        %v1201 = vadd.f32 0.0, %v1200
        %v1202 = vpop.f32.mrf.mxu0
        %1203 = vmatprep.mubr.f32.mxu0 0.0
        %1204 = vmatmul.mubr.f32.gmra.mxu0 %v893
        %v1205 = vpop.f32.mrf.mxu0
        %v1206 = vadd.f32 0.0, %v1205
        %v1207 = vpop.f32.mrf.mxu0
        %1208 = vmatprep.mubr.f32.mxu0 0.0
        %1209 = vmatmul.mubr.f32.gmra.mxu0 %v895
        %v1210 = vpop.f32.mrf.mxu0
        %v1211 = vadd.f32 0.0, %v1210
        %v1212 = vpop.f32.mrf.mxu0
        %1213 = vmatprep.mubr.f32.mxu0 0.0
        %1214 = vmatmul.mubr.f32.gmra.mxu0 %v897
        %v1215 = vpop.f32.mrf.mxu0
        %v1216 = vadd.f32 0.0, %v1215
        %v1217 = vpop.f32.mrf.mxu0
        %1218 = vmatprep.mubr.f32.mxu0 0.0
        %1219 = vmatmul.mubr.f32.gmra.mxu0 %v899
        %v1220 = vpop.f32.mrf.mxu0
        %v1221 = vadd.f32 0.0, %v1220
        %v1222 = vpop.f32.mrf.mxu0
        %1223 = vmatprep.mubr.f32.mxu0 0.0
        %1224 = vmatmul.mubr.f32.gmra.mxu0 %v901
        %v1225 = vpop.f32.mrf.mxu0
        %v1226 = vadd.f32 0.0, %v1225
        %v1227 = vpop.f32.mrf.mxu0
        %1228 = vmatprep.mubr.f32.mxu0 0.0
        %1229 = vmatmul.mubr.f32.gmra.mxu0 %v903
        %v1230 = vpop.f32.mrf.mxu0
        %v1231 = vadd.f32 0.0, %v1230
        %v1232 = vpop.f32.mrf.mxu0
        %1233 = vmatprep.mubr.f32.mxu0 0.0
        %1234 = vmatmul.mubr.f32.gmra.mxu0 %v905
        %v1235 = vpop.f32.mrf.mxu0
        %v1236 = vadd.f32 0.0, %v1235
        %v1237 = vpop.f32.mrf.mxu0
        %1238 = vmatprep.mubr.f32.mxu0 0.0
        %1239 = vmatmul.mubr.f32.gmra.mxu0 %v907
        %v1240 = vpop.f32.mrf.mxu0
        %v1241 = vadd.f32 0.0, %v1240
        %v1242 = vpop.f32.mrf.mxu0
        %1243 = vmatprep.mubr.f32.mxu0 0.0
        %1244 = vmatmul.mubr.f32.gmra.mxu0 %v909
        %v1245 = vpop.f32.mrf.mxu0
        %v1246 = vadd.f32 0.0, %v1245
        %v1247 = vpop.f32.mrf.mxu0
        %1248 = vmatprep.mubr.f32.mxu0 0.0
        %1249 = vmatmul.mubr.f32.gmra.mxu0 %v911
        %v1250 = vpop.f32.mrf.mxu0
        %v1251 = vadd.f32 0.0, %v1250
        %v1252 = vpop.f32.mrf.mxu0
        %1253 = vmatprep.mubr.f32.mxu0 0.0
        %1254 = vmatmul.mubr.f32.gmra.mxu0 %v913
        %v1255 = vpop.f32.mrf.mxu0
        %v1256 = vadd.f32 0.0, %v1255
        %v1257 = vpop.f32.mrf.mxu0
        %1258 = vmatprep.mubr.f32.mxu0 0.0
        %1259 = vmatmul.mubr.f32.gmra.mxu0 %v915
        %v1260 = vpop.f32.mrf.mxu0
        %v1261 = vadd.f32 0.0, %v1260
        %v1262 = vpop.f32.mrf.mxu0
        %1263 = vmatprep.mubr.f32.mxu0 0.0
        %1264 = vmatmul.mubr.f32.gmra.mxu0 %v917
        %v1265 = vpop.f32.mrf.mxu0
        %v1266 = vadd.f32 0.0, %v1265
        %v1267 = vpop.f32.mrf.mxu0
        %1268 = vmatprep.mubr.f32.mxu0 0.0
        %1269 = vmatmul.mubr.f32.gmra.mxu0 %v919
        %v1270 = vpop.f32.mrf.mxu0
        %v1271 = vadd.f32 0.0, %v1270
        %v1272 = vpop.f32.mrf.mxu0
        %1273 = vdwg.mxu0
        %v1274 = vadd.f32 %v1113, %v1196
        %v1275 = vadd.f32 %v1114, %v1201
        %v1276 = vadd.f32 %v1115, %v1206
        %v1277 = vadd.f32 %v1116, %v1211
        %v1278 = vadd.f32 %v1117, %v1216
        %v1279 = vadd.f32 %v1118, %v1221
        %v1280 = vadd.f32 %v1119, %v1226
        %v1281 = vadd.f32 %v1120, %v1231
        %v1282 = vadd.f32 %v1121, %v1236
        %v1283 = vadd.f32 %v1122, %v1241
        %v1284 = vadd.f32 %v1123, %v1246
        %v1285 = vadd.f32 %v1124, %v1251
        %v1286 = vadd.f32 %v1125, %v1256
        %v1287 = vadd.f32 %v1126, %v1261
        %v1288 = vadd.f32 %v1127, %v1266
        %v1289 = vadd.f32 %v1128, %v1271
        %vm1290 = vcmask 261120
        %1291 = vst.msk [vmem:[#allocation2] sm:$0xff] %vm1290, %v1274
        %1292 = vst.msk [vmem:[#allocation2 + $0x8] sm:$0xff] %vm1290, %v1275
        %1293 = vst.msk [vmem:[#allocation2 + $0x10] sm:$0xff] %vm1290, %v1276
        %1294 = vst.msk [vmem:[#allocation2 + $0x18] sm:$0xff] %vm1290, %v1277
        %1295 = vst.msk [vmem:[#allocation2 + $0x20] sm:$0xff] %vm1290, %v1278
        %1296 = vst.msk [vmem:[#allocation2 + $0x28] sm:$0xff] %vm1290, %v1279
        %1297 = vst.msk [vmem:[#allocation2 + $0x30] sm:$0xff] %vm1290, %v1280
        %1298 = vst.msk [vmem:[#allocation2 + $0x38] sm:$0xff] %vm1290, %v1281
        %1299 = vst.msk [vmem:[#allocation2 + $0x40] sm:$0xff] %vm1290, %v1282
        %1300 = vst.msk [vmem:[#allocation2 + $0x48] sm:$0xff] %vm1290, %v1283
        %1301 = vst.msk [vmem:[#allocation2 + $0x50] sm:$0xff] %vm1290, %v1284
        %1302 = vst.msk [vmem:[#allocation2 + $0x58] sm:$0xff] %vm1290, %v1285
        %1303 = vst.msk [vmem:[#allocation2 + $0x60] sm:$0xff] %vm1290, %v1286
        %1304 = vst.msk [vmem:[#allocation2 + $0x68] sm:$0xff] %vm1290, %v1287
        %1305 = vst.msk [vmem:[#allocation2 + $0x70] sm:$0xff] %vm1290, %v1288
        %1306 = vst.msk [vmem:[#allocation2 + $0x78] sm:$0xff] %vm1290, %v1289
        %1307 = vst.msk [vmem:[#allocation3] sm:$0xff] %vm1000, %v728
        %1308 = vst.msk [vmem:[#allocation3 + $0x8] sm:$0xff] %vm1000, %v729
        %1309 = vst.msk [vmem:[#allocation3 + $0x10] sm:$0xff] %vm1000, %v730
        %1310 = vst.msk [vmem:[#allocation3 + $0x18] sm:$0xff] %vm1000, %v731
        %1311 = vst.msk [vmem:[#allocation3 + $0x20] sm:$0xff] %vm1000, %v732
        %1312 = vst.msk [vmem:[#allocation3 + $0x28] sm:$0xff] %vm1000, %v733
        %1313 = vst.msk [vmem:[#allocation3 + $0x30] sm:$0xff] %vm1000, %v734
        %1314 = vst.msk [vmem:[#allocation3 + $0x38] sm:$0xff] %vm1000, %v735
        %1315 = vst.msk [vmem:[#allocation3 + $0x40] sm:$0xff] %vm1000, %v736
        %1316 = vst.msk [vmem:[#allocation3 + $0x48] sm:$0xff] %vm1000, %v737
        %1317 = vst.msk [vmem:[#allocation3 + $0x50] sm:$0xff] %vm1000, %v738
        %1318 = vst.msk [vmem:[#allocation3 + $0x58] sm:$0xff] %vm1000, %v739
        %1319 = vst.msk [vmem:[#allocation3 + $0x60] sm:$0xff] %vm1000, %v740
        %1320 = vst.msk [vmem:[#allocation3 + $0x68] sm:$0xff] %vm1000, %v741
        %1321 = vst.msk [vmem:[#allocation3 + $0x70] sm:$0xff] %vm1000, %v742
        %1322 = vst.msk [vmem:[#allocation3 + $0x78] sm:$0xff] %vm1000, %v743
        %p1323 = scmp.eq.s32.totalorder %s27, 1
        // Predicated region
        $region83: #{tpu_custom_call.1} parent=73 // pred_check
          %p1324 = pneg %p1323
        $region84: #{tpu_custom_call.1} parent=73 // pred_check_branch
          %1326 = sbr.rel (%p1324) target = $region86
        $region85: #{tpu_custom_call.1} parent=73 // pred_region
          %v1327 = vld [vmem:[#allocation4] sm:$0xff]
          %v1328 = vld [vmem:[#allocation4 + $0x8] sm:$0xff]
          %v1329 = vld [vmem:[#allocation4 + $0x10] sm:$0xff]
          %v1330 = vld [vmem:[#allocation4 + $0x18] sm:$0xff]
          %v1331 = vld [vmem:[#allocation4 + $0x20] sm:$0xff]
          %v1332 = vld [vmem:[#allocation4 + $0x28] sm:$0xff]
          %v1333 = vld [vmem:[#allocation4 + $0x30] sm:$0xff]
          %v1334 = vld [vmem:[#allocation4 + $0x38] sm:$0xff]
          %v1335 = vld [vmem:[#allocation4 + $0x40] sm:$0xff]
          %v1336 = vld [vmem:[#allocation4 + $0x48] sm:$0xff]
          %v1337 = vld [vmem:[#allocation4 + $0x50] sm:$0xff]
          %v1338 = vld [vmem:[#allocation4 + $0x58] sm:$0xff]
          %v1339 = vld [vmem:[#allocation4 + $0x60] sm:$0xff]
          %v1340 = vld [vmem:[#allocation4 + $0x68] sm:$0xff]
          %v1341 = vld [vmem:[#allocation4 + $0x70] sm:$0xff]
          %v1342 = vld [vmem:[#allocation4 + $0x78] sm:$0xff]
          %v1343 = vrcp.pop %v1327
          %v1344 = vmul.f32 1.0, %v1343
          %v1345 = vrcp.pop %v1328
          %v1346 = vmul.f32 1.0, %v1345
          %v1347 = vrcp.pop %v1329
          %v1348 = vmul.f32 1.0, %v1347
          %v1349 = vrcp.pop %v1330
          %v1350 = vmul.f32 1.0, %v1349
          %v1351 = vrcp.pop %v1331
          %v1352 = vmul.f32 1.0, %v1351
          %v1353 = vrcp.pop %v1332
          %v1354 = vmul.f32 1.0, %v1353
          %v1355 = vrcp.pop %v1333
          %v1356 = vmul.f32 1.0, %v1355
          %v1357 = vrcp.pop %v1334
          %v1358 = vmul.f32 1.0, %v1357
          %v1359 = vrcp.pop %v1335
          %v1360 = vmul.f32 1.0, %v1359
          %v1361 = vrcp.pop %v1336
          %v1362 = vmul.f32 1.0, %v1361
          %v1363 = vrcp.pop %v1337
          %v1364 = vmul.f32 1.0, %v1363
          %v1365 = vrcp.pop %v1338
          %v1366 = vmul.f32 1.0, %v1365
          %v1367 = vrcp.pop %v1339
          %v1368 = vmul.f32 1.0, %v1367
          %v1369 = vrcp.pop %v1340
          %v1370 = vmul.f32 1.0, %v1369
          %v1371 = vrcp.pop %v1341
          %v1372 = vmul.f32 1.0, %v1371
          %v1373 = vrcp.pop %v1342
          %v1374 = vmul.f32 1.0, %v1373
          %v1375 = vld [vmem:[#allocation2] sm:$0xff]
          %v1376 = vld [vmem:[#allocation2 + $0x8] sm:$0xff]
          %v1377 = vld [vmem:[#allocation2 + $0x10] sm:$0xff]
          %v1378 = vld [vmem:[#allocation2 + $0x18] sm:$0xff]
          %v1379 = vld [vmem:[#allocation2 + $0x20] sm:$0xff]
          %v1380 = vld [vmem:[#allocation2 + $0x28] sm:$0xff]
          %v1381 = vld [vmem:[#allocation2 + $0x30] sm:$0xff]
          %v1382 = vld [vmem:[#allocation2 + $0x38] sm:$0xff]
          %v1383 = vld [vmem:[#allocation2 + $0x40] sm:$0xff]
          %v1384 = vld [vmem:[#allocation2 + $0x48] sm:$0xff]
          %v1385 = vld [vmem:[#allocation2 + $0x50] sm:$0xff]
          %v1386 = vld [vmem:[#allocation2 + $0x58] sm:$0xff]
          %v1387 = vld [vmem:[#allocation2 + $0x60] sm:$0xff]
          %v1388 = vld [vmem:[#allocation2 + $0x68] sm:$0xff]
          %v1389 = vld [vmem:[#allocation2 + $0x70] sm:$0xff]
          %v1390 = vld [vmem:[#allocation2 + $0x78] sm:$0xff]
          %1392 = vset.pattern.permute.xlu0 0
          %1393 = vperm.xlu0 %1392, %v1344
          %v1394 = vpop.permute.xlu0 %1393
          %1397 = vset.pattern.permute.xlu0 0
          %1398 = vperm.xlu0 %1397, %v1346
          %v1399 = vpop.permute.xlu0 %1398
          %1402 = vset.pattern.permute.xlu0 0
          %1403 = vperm.xlu0 %1402, %v1348
          %v1404 = vpop.permute.xlu0 %1403
          %1407 = vset.pattern.permute.xlu0 0
          %1408 = vperm.xlu0 %1407, %v1350
          %v1409 = vpop.permute.xlu0 %1408
          %1412 = vset.pattern.permute.xlu0 0
          %1413 = vperm.xlu0 %1412, %v1352
          %v1414 = vpop.permute.xlu0 %1413
          %1417 = vset.pattern.permute.xlu0 0
          %1418 = vperm.xlu0 %1417, %v1354
          %v1419 = vpop.permute.xlu0 %1418
          %1422 = vset.pattern.permute.xlu0 0
          %1423 = vperm.xlu0 %1422, %v1356
          %v1424 = vpop.permute.xlu0 %1423
          %1427 = vset.pattern.permute.xlu0 0
          %1428 = vperm.xlu0 %1427, %v1358
          %v1429 = vpop.permute.xlu0 %1428
          %1432 = vset.pattern.permute.xlu0 0
          %1433 = vperm.xlu0 %1432, %v1360
          %v1434 = vpop.permute.xlu0 %1433
          %1437 = vset.pattern.permute.xlu0 0
          %1438 = vperm.xlu0 %1437, %v1362
          %v1439 = vpop.permute.xlu0 %1438
          %1442 = vset.pattern.permute.xlu0 0
          %1443 = vperm.xlu0 %1442, %v1364
          %v1444 = vpop.permute.xlu0 %1443
          %1447 = vset.pattern.permute.xlu0 0
          %1448 = vperm.xlu0 %1447, %v1366
          %v1449 = vpop.permute.xlu0 %1448
          %1452 = vset.pattern.permute.xlu0 0
          %1453 = vperm.xlu0 %1452, %v1368
          %v1454 = vpop.permute.xlu0 %1453
          %1457 = vset.pattern.permute.xlu0 0
          %1458 = vperm.xlu0 %1457, %v1370
          %v1459 = vpop.permute.xlu0 %1458
          %1462 = vset.pattern.permute.xlu0 0
          %1463 = vperm.xlu0 %1462, %v1372
          %v1464 = vpop.permute.xlu0 %1463
          %1467 = vset.pattern.permute.xlu0 0
          %1468 = vperm.xlu0 %1467, %v1374
          %v1469 = vpop.permute.xlu0 %1468
          %v1471 = vmul.f32 %v1375, %v1394
          %v1472 = vmul.f32 %v1376, %v1399
          %v1473 = vmul.f32 %v1377, %v1404
          %v1474 = vmul.f32 %v1378, %v1409
          %v1475 = vmul.f32 %v1379, %v1414
          %v1476 = vmul.f32 %v1380, %v1419
          %v1477 = vmul.f32 %v1381, %v1424
          %v1478 = vmul.f32 %v1382, %v1429
          %v1479 = vmul.f32 %v1383, %v1434
          %v1480 = vmul.f32 %v1384, %v1439
          %v1481 = vmul.f32 %v1385, %v1444
          %v1482 = vmul.f32 %v1386, %v1449
          %v1483 = vmul.f32 %v1387, %v1454
          %v1484 = vmul.f32 %v1388, %v1459
          %v1485 = vmul.f32 %v1389, %v1464
          %v1486 = vmul.f32 %v1390, %v1469
          %1487 = vxpose.xlu0.b32.start [1/16] %v1471, 128
          %1488 = vxpose.xlu0.b32.cont [2/16] %v1472, 128
          %1489 = vxpose.xlu0.b32.cont [3/16] %v1473, 128
          %1490 = vxpose.xlu0.b32.cont [4/16] %v1474, 128
          %1491 = vxpose.xlu0.b32.cont [5/16] %v1475, 128
          %1492 = vxpose.xlu0.b32.cont [6/16] %v1476, 128
          %1493 = vxpose.xlu0.b32.cont [7/16] %v1477, 128
          %1494 = vxpose.xlu0.b32.cont [8/16] %v1478, 128
          %1495 = vxpose.xlu0.b32.cont [9/16] %v1479, 128
          %1496 = vxpose.xlu0.b32.cont [10/16] %v1480, 128
          %1497 = vxpose.xlu0.b32.cont [11/16] %v1481, 128
          %1498 = vxpose.xlu0.b32.cont [12/16] %v1482, 128
          %1499 = vxpose.xlu0.b32.cont [13/16] %v1483, 128
          %1500 = vxpose.xlu0.b32.cont [14/16] %v1484, 128
          %1501 = vxpose.xlu0.b32.cont [15/16] %v1485, 128
          %1502 = vxpose.xlu0.b32.end [16/16] %v1486, 128
          %v1503 = vpop.trf.xlu0
          %v1504 = vpop.trf.xlu0
          %v1505 = vpop.trf.xlu0
          %v1506 = vpop.trf.xlu0
          %v1507 = vpop.trf.xlu0
          %v1508 = vpop.trf.xlu0
          %v1509 = vpop.trf.xlu0
          %v1510 = vpop.trf.xlu0
          %v1511 = vpop.trf.xlu0
          %v1512 = vpop.trf.xlu0
          %v1513 = vpop.trf.xlu0
          %v1514 = vpop.trf.xlu0
          %v1515 = vpop.trf.xlu0
          %v1516 = vpop.trf.xlu0
          %v1517 = vpop.trf.xlu0
          %v1518 = vpop.trf.xlu0
          %v1519 = vld [vmem:[%s320] sm:$0xff]
          %v1520 = vld [vmem:[%s320 + $0x8] sm:$0xff]
          %v1521 = vld [vmem:[%s320 + $0x10] sm:$0xff]
          %v1522 = vld [vmem:[%s320 + $0x18] sm:$0xff]
          %s1523 = sld [smem:[#allocation5]]
          %v1524 = vstv %s1523
          %v1525 = vmul.f32 %v1524, %v1503
          %v1526 = vmul.f32 %v1524, %v1504
          %v1527 = vmul.f32 %v1524, %v1505
          %v1528 = vmul.f32 %v1524, %v1506
          %v1529 = vadd.f32 %v1519, %v1525
          %v1530 = vadd.f32 %v1520, %v1526
          %v1531 = vadd.f32 %v1521, %v1527
          %v1532 = vadd.f32 %v1522, %v1528
          %1533 = vst [vmem:[%s370] sm:$0xff] %v1529
          %1534 = vst [vmem:[%s370 + $0x8] sm:$0xff] %v1530
          %1535 = vst [vmem:[%s370 + $0x10] sm:$0xff] %v1531
          %1536 = vst [vmem:[%s370 + $0x18] sm:$0xff] %v1532
        $region86: #{tpu_custom_call.1} parent=73 // pred_fallthru
          _
        %s1537 = sand.u32 %s182, 1
        %s1538 = scalar_lea.sflag [#allocation8], %s1537
        %s1539 = sand.u32 %s182, 1
        %s1540 = smul.addr %s1539, 32
        %s1541 = scalar_lea.vmem [#allocation7], %s1540
        // Predicated region
        $region87: #{tpu_custom_call.1} parent=73 // pred_check
          %p1542 = pneg %p192
        $region88: #{tpu_custom_call.1} parent=73 // pred_check_branch
          %1544 = sbr.rel (%p1542) target = $region90
        $region89: #{tpu_custom_call.1} parent=73 // pred_region
          %s1546 = ssub.s32 512, 512
          %1547 = vsyncadd %s1538, %s1546
          %s1548 = smul.addr %s25, 8
          %s1549 = sadd.s32 %s26, %s1548
          %s1550 = smul.addr %s1549, 128
          %s1551 = scalar_lea.hbm %s5, %s1550
          %s1552 = sshll.u32 %s1541, 4
          %s1553 = int_to_ptr.vmem [resolvable:$true] %s1552
          %1558 = dma.vmem_to_hbm [thread:$0]  %s1553, 512, %s1551, %s1538, 128, 256, 8
        $region90: #{tpu_custom_call.1} parent=73 // pred_fallthru
          _
      $region74: #{tpu_custom_call.1} parent=5 // pred_fallthru
        _
      %p1559 = scmp.le.s32.totalorder 2, %s15
      // Predicated region
      $region91: #{tpu_custom_call.1} parent=5 // pred_check
        %p1560 = pneg %p1559
      $region92: #{tpu_custom_call.1} parent=5 // pred_check_branch
        %1562 = sbr.rel (%p1560) target = $region94
      $region93: #{tpu_custom_call.1} parent=5 // pred_region
        %s1563 = ssub.s32 %s15, 2
        // Predicated region
        $region95: #{tpu_custom_call.1} parent=93 // pred_check
          %p1564 = pneg %p198
        $region96: #{tpu_custom_call.1} parent=93 // pred_check_branch
          %1566 = sbr.rel (%p1564) target = $region98
        $region97: #{tpu_custom_call.1} parent=93 // pred_region
          %s1567 = sand.u32 %s183, 1
          %s1568 = scalar_lea.sflag [#allocation8], %s1567
          %s1569 = sand.u32 %s183, 1
          %s1570 = smul.addr %s1569, 32
          %s1571 = scalar_lea.vmem [#allocation7], %s1570
          %1572 = dma.done %s1568, 512
        $region98: #{tpu_custom_call.1} parent=93 // pred_fallthru
          _
      $region94: #{tpu_custom_call.1} parent=5 // pred_fallthru
        _
    $region6: #{tpu_custom_call.1} parent=1 // loop_footer
      %s19 = sadd.s32 1, %s15
    $region7: #{tpu_custom_call.1} parent=1 // loop_footer_branch
      %14 = sbr.rel target = $region3
    $region8: #{tpu_custom_call.1} parent=1 // loop_exit
      _
    %1573 = vsyncpa [#allocation8], 1
    %s1574 = scalar_lea.sflag [#allocation8], 1
    %1575 = vsyncpa %s1574, 1

</llo_original>
